<compile_context>
chip_gen: v7x
topology: tpu7x:2x2x1
jax: 0.10.0
libtpu: 0.0.40
codegen_flags: <defaults>
</compile_context>

<pallas_src>
import math

import jax
import jax.numpy as jnp
from jax.experimental import pallas as pl
from jax.experimental.pallas import tpu as pltpu

# ---------------- static model config (small, deterministic) ----------------
B, T, D = 2, 16, 32          # batch, timesteps, neural_dim
N_DAYS = 4                   # number of recording days
KLEN, STRIDE = 4, 2          # temporal unfold kernel length / stride
H = 32                       # GRU hidden dim
N_CLASSES = 8
C = N_CLASSES + 1            # logits dim (phoneme classes + CTC blank)
C_PAD = 128                  # lane-dense logits width inside the kernel
GK = 5                       # gaussian smoothing kernel size (odd, 'same' pad)
SIGMA = 2.0
TPRIME = (T - KLEN) // STRIDE + 1   # 7
TPAD = 8                            # T' padded to a full sublane tile
DK = D * KLEN                       # GRU input feature dim (= 128 here)
G3 = 3 * H                          # packed gate width [r|z|n] = 96
GPAD = 128                          # lane-dense packed gate width

# fixed (non-learned) gaussian smoothing taps, computed deterministically
_g = [math.exp(-0.5 * ((i - (GK - 1) / 2.0) / SIGMA) ** 2) for i in range(GK)]
GW = [w / sum(_g) for w in _g]


def _make_smooth_unfold_stack():
    """A_stack has shape (KLEN*TPAD, T): row k*TPAD + t' holds the gaussian
    taps centered at timestep t'*STRIDE + k (zero 'same' padding); rows with
    t' >= TPRIME are zero padding. It folds depthwise smoothing AND the
    unfold's row selection into one matmul operand with 8-sublane-aligned
    per-k blocks."""
    pad = (GK - 1) // 2
    a = [[0.0] * T for _ in range(KLEN * TPAD)]
    for k in range(KLEN):
        for tp in range(TPRIME):
            tc = tp * STRIDE + k
            row = k * TPAD + tp
            for j in range(GK):
                s = tc + j - pad
                if 0 <= s < T:
                    a[row][s] += GW[j]
    return jnp.asarray(a, dtype=jnp.float32)      # (KLEN*TPAD, T)


# ----------------------------- fused Pallas kernel ----------------------------
def _fused_kernel(day_ref,                        # scalar prefetch (SMEM, shape (B,))
                  x_ref, a_ref, dw_ref, db_ref,
                  wih_ref, bih_ref, whh_ref, bhh_ref, wout_ref, bout_ref,
                  out_ref, h_scratch):
    """Full forward for the whole batch:
    smoothing -> day linear + Softsign -> unfold -> GRU (batched, unrolled)
    -> logits."""

    # ---- prologue: day linear + folded smoothing/unfold + Softsign, per b ----
    ys = []
    for b in range(B):                            # static unroll, B = 2
        d = day_ref[b]                            # day index scalar from SMEM
        dw = dw_ref[d]                            # (D, D)  dynamic day gather
        db = db_ref[d]                            # (1, D)
        xd = jnp.dot(x_ref[b], dw, preferred_element_type=jnp.float32)    # (T, D)
        y = jnp.dot(a_ref[...], xd, preferred_element_type=jnp.float32) + db
        # Softsign via EUP approx reciprocal (off the VPU critical path)
        ys.append(y * pl.reciprocal(1.0 + jnp.abs(y), approx=True))       # (KLEN*TPAD, D)

    # ---- hoisted input-side GRU pre-activations, gates packed [r|z|n] lanes ----
    # gi rows are ordered b*TPAD + t; lanes 0:H=r, H:2H=z, 2H:3H=n, rest zero.
    gi = bih_ref[...]                             # (1, GPAD), broadcasts
    for k in range(KLEN):                         # static unroll, KLEN = 4
        lhs = jnp.concatenate(
            [ys[b][k * TPAD:(k + 1) * TPAD, :] for b in range(B)], axis=0)  # (B*TPAD, D)
        gi = gi + jnp.dot(lhs, wih_ref[k], preferred_element_type=jnp.float32)

    # ---- batched GRU recurrence: one packed (B,H)x(H,GPAD) matmul per step ----
    whh = whh_ref[...]                            # (H, GPAD)
    bhh = bhh_ref[...]                            # (1, GPAD)
    h_scratch[...] = jnp.zeros_like(h_scratch)    # also zeroes the padded t row
    h = jnp.zeros((B, H), jnp.float32)
    for t in range(TPRIME):                       # static unroll, T' = 7
        gi_t = jnp.concatenate(
            [gi[b * TPAD + t: b * TPAD + t + 1, :] for b in range(B)], axis=0)  # (B, GPAD)
        if t == 0:
            gh = bhh                              # h == 0 -> skip the matmul
        else:
            gh = jnp.dot(h, whh, preferred_element_type=jnp.float32) + bhh       # (B, GPAD)
        r = jax.nn.sigmoid(gi_t[:, 0:H] + gh[:, 0:H])
        z = jax.nn.sigmoid(gi_t[:, H:2 * H] + gh[:, H:2 * H])
        n = jnp.tanh(gi_t[:, 2 * H:3 * H] + r * gh[:, 2 * H:3 * H])  # b_hn inside r*(.)
        h = (1.0 - z) * n if t == 0 else (1.0 - z) * n + z * h
        for b in range(B):
            h_scratch[pl.ds(b * TPAD + t, 1), :] = h[b:b + 1, :]

    # ---- logits head: one lane-dense (B*TPAD,H) x (H,128) matmul ----
    h_all = h_scratch[...]                        # (B*TPAD, H)
    logits = jnp.dot(h_all, wout_ref[...],
                     preferred_element_type=jnp.float32) + bout_ref[...]  # (B*TPAD, C_PAD)
    for b in range(B):
        out_ref[b] = logits[b * TPAD:(b + 1) * TPAD, :]   # (TPAD, C_PAD) aligned store


# --------------------------- parameters (deterministic) -----------------------
def init_params(key):
    ks = jax.random.split(key, 7)
    s = 1.0 / math.sqrt(H)
    u = lambda k, shape: jax.random.uniform(k, shape, jnp.float32, -s, s)

    # day-specific input layers: identity init (+ small noise), zero bias
    day_w = jnp.tile(jnp.eye(D, dtype=jnp.float32)[None], (N_DAYS, 1, 1))
    day_w = day_w + 0.01 * jax.random.normal(ks[0], (N_DAYS, D, D), jnp.float32)
    day_b = jnp.zeros((N_DAYS, 1, D), jnp.float32)

    # canonical (torch-convention) GRU params:
    #   w_ih rows ordered d*KLEN + k (torch.nn.Unfold channel-major),
    #   columns gate-ordered [r | z | n]
    w_ih_c = u(ks[1], (DK, G3))
    w_hh_c = u(ks[2], (H, G3))
    b_ih_c = u(ks[3], (1, G3))
    b_hh_c = u(ks[4], (1, G3))
    w_out_c = u(ks[5], (H, C))
    b_out_c = u(ks[6], (1, C))

    # kernel layout: input-side weights packed per kernel-position, gates along
    # lanes [r|z|n], zero padded to 128 lanes; h-side weights/biases packed the
    # same way so one matmul produces all three gates.
    w_ih_k = jnp.transpose(w_ih_c.reshape(D, KLEN, G3), (1, 0, 2))       # (KLEN, D, 3H)
    w_ih = jnp.zeros((KLEN, D, GPAD), jnp.float32).at[:, :, :G3].set(w_ih_k)
    b_ih = jnp.zeros((1, GPAD), jnp.float32).at[:, :G3].set(b_ih_c)
    w_hh = jnp.zeros((H, GPAD), jnp.float32).at[:, :G3].set(w_hh_c)
    b_hh = jnp.zeros((1, GPAD), jnp.float32).at[:, :G3].set(b_hh_c)

    # logits head padded to a lane-dense 128-wide output
    w_out = jnp.zeros((H, C_PAD), jnp.float32).at[:, :C].set(w_out_c)
    b_out = jnp.zeros((1, C_PAD), jnp.float32).at[:, :C].set(b_out_c)

    return dict(day_w=day_w, day_b=day_b,
                w_ih=w_ih, b_ih=b_ih, w_hh=w_hh, b_hh=b_hh,
                w_out=w_out, b_out=b_out,
                a_smooth=_make_smooth_unfold_stack())


# ------------------------------ forward (ModelWrapper) ------------------------
def model_wrapper_forward(params, neural_input, day_idx):
    # TODO(synk): B2P2TModel / PhonemeSampleBatch source is not provided; the
    # forward is reconstructed as the underlying GRU neural decoder:
    # gaussian smoothing -> per-day linear + Softsign -> temporal unfold
    # (kernelLen/strideLen) -> single-layer unidirectional GRU -> logits head.
    x = neural_input.astype(jnp.float32)
    day_idx = day_idx.astype(jnp.int32)

    logits_pad = pl.pallas_call(
        _fused_kernel,
        out_shape=jax.ShapeDtypeStruct((B, TPAD, C_PAD), jnp.float32),
        grid_spec=pltpu.PrefetchScalarGridSpec(
            num_scalar_prefetch=1,               # day_idx -> SMEM (in-kernel gather)
            grid=(1,),                           # whole batch fused into one step
            in_specs=[
                pl.BlockSpec((B, T, D), lambda i, day: (0, 0, 0)),            # x
                pl.BlockSpec((KLEN * TPAD, T), lambda i, day: (0, 0)),        # A_stack
                pl.BlockSpec((N_DAYS, D, D), lambda i, day: (0, 0, 0)),       # day_w table
                pl.BlockSpec((N_DAYS, 1, D), lambda i, day: (0, 0, 0)),       # day_b table
                pl.BlockSpec((KLEN, D, GPAD), lambda i, day: (0, 0, 0)),      # w_ih packed
                pl.BlockSpec((1, GPAD), lambda i, day: (0, 0)),               # b_ih packed
                pl.BlockSpec((H, GPAD), lambda i, day: (0, 0)),               # w_hh packed
                pl.BlockSpec((1, GPAD), lambda i, day: (0, 0)),               # b_hh packed
                pl.BlockSpec((H, C_PAD), lambda i, day: (0, 0)),              # w_out
                pl.BlockSpec((1, C_PAD), lambda i, day: (0, 0)),              # b_out
            ],
            out_specs=pl.BlockSpec((B, TPAD, C_PAD), lambda i, day: (0, 0, 0)),
            scratch_shapes=[pltpu.VMEM((B * TPAD, H), jnp.float32)],
        ),
        compiler_params=pltpu.CompilerParams(dimension_semantics=("arbitrary",)),
    )(day_idx, x, params["a_smooth"], params["day_w"], params["day_b"],
      params["w_ih"], params["b_ih"], params["w_hh"], params["b_hh"],
      params["w_out"], params["b_out"])

    return logits_pad[:, :TPRIME, :C]             # (B, T', C)


# ------------------------------------ main ------------------------------------
if __name__ == "__main__":
    key = jax.random.PRNGKey(0)
    k_param, k_x = jax.random.split(key)
    params = init_params(k_param)

    neural_input = jax.random.normal(k_x, (B, T, D), jnp.float32)
    day_idx = jnp.array([0, 2], dtype=jnp.int32)

    logits = jax.jit(model_wrapper_forward)(params, neural_input, day_idx)
    logits = jax.block_until_ready(logits)

    assert logits.shape == (B, TPRIME, C), logits.shape
    assert logits.dtype == jnp.float32
    assert bool(jnp.all(jnp.isfinite(logits)))
    print("KERNEL_OK")
</pallas_src>

<mosaic_0001>
module attributes {stable_mosaic.version = 11 : i64} {
  func.func @_fused_kernel(%arg0: i32, %arg1: memref<2xi32, #tpu.memory_space<smem>>, %arg2: memref<2x16x32xf32, #tpu.memory_space<vmem>>, %arg3: memref<32x16xf32, #tpu.memory_space<vmem>>, %arg4: memref<4x32x32xf32, #tpu.memory_space<vmem>>, %arg5: memref<4x1x32xf32, #tpu.memory_space<vmem>>, %arg6: memref<4x32x128xf32, #tpu.memory_space<vmem>>, %arg7: memref<1x128xf32, #tpu.memory_space<vmem>>, %arg8: memref<32x128xf32, #tpu.memory_space<vmem>>, %arg9: memref<1x128xf32, #tpu.memory_space<vmem>>, %arg10: memref<32x128xf32, #tpu.memory_space<vmem>>, %arg11: memref<1x128xf32, #tpu.memory_space<vmem>>, %arg12: memref<2x8x128xf32, #tpu.memory_space<vmem>>, %arg13: memref<16x32xf32, #tpu.memory_space<vmem>>) attributes {dimension_semantics = [#tpu.dimension_semantics<arbitrary>], iteration_bounds = array<i64: 1>, scalar_prefetch = 1 : i64, scratch_operands = 1 : i64, tpu.core_type = #tpu.core_type<tc>, window_params = [{pipeline_mode = #tpu.pipeline_mode<synchronous>, transform_indices = @transform_0, window_bounds = array<i64: 2, 16, 32>}, {pipeline_mode = #tpu.pipeline_mode<synchronous>, transform_indices = @transform_1, window_bounds = array<i64: 32, 16>}, {pipeline_mode = #tpu.pipeline_mode<synchronous>, transform_indices = @transform_2, window_bounds = array<i64: 4, 32, 32>}, {pipeline_mode = #tpu.pipeline_mode<synchronous>, transform_indices = @transform_3, window_bounds = array<i64: 4, 1, 32>}, {pipeline_mode = #tpu.pipeline_mode<synchronous>, transform_indices = @transform_4, window_bounds = array<i64: 4, 32, 128>}, {pipeline_mode = #tpu.pipeline_mode<synchronous>, transform_indices = @transform_5, window_bounds = array<i64: 1, 128>}, {pipeline_mode = #tpu.pipeline_mode<synchronous>, transform_indices = @transform_6, window_bounds = array<i64: 32, 128>}, {pipeline_mode = #tpu.pipeline_mode<synchronous>, transform_indices = @transform_7, window_bounds = array<i64: 1, 128>}, {pipeline_mode = #tpu.pipeline_mode<synchronous>, transform_indices = @transform_8, window_bounds = array<i64: 32, 128>}, {pipeline_mode = #tpu.pipeline_mode<synchronous>, transform_indices = @transform_9, window_bounds = array<i64: 1, 128>}, {pipeline_mode = #tpu.pipeline_mode<synchronous>, transform_indices = @transform_10, window_bounds = array<i64: 2, 8, 128>}]} {
    %c0 = arith.constant 0 : index
    %0 = memref.load %arg1[%c0] : memref<2xi32, #tpu.memory_space<smem>>
    %1 = arith.index_cast %0 : i32 to index
    %c0_0 = arith.constant 0 : index
    %c0_1 = arith.constant 0 : index
    %2 = vector.load %arg4[%1, %c0_0, %c0_1] : memref<4x32x32xf32, #tpu.memory_space<vmem>>, vector<1x32x32xf32>
    %3 = vector.shape_cast %2 : vector<1x32x32xf32> to vector<32x32xf32>
    %4 = arith.index_cast %0 : i32 to index
    %c0_2 = arith.constant 0 : index
    %c0_3 = arith.constant 0 : index
    %5 = vector.load %arg5[%4, %c0_2, %c0_3] : memref<4x1x32xf32, #tpu.memory_space<vmem>>, vector<1x1x32xf32>
    %6 = vector.shape_cast %5 : vector<1x1x32xf32> to vector<1x32xf32>
    %c0_4 = arith.constant 0 : index
    %c0_5 = arith.constant 0 : index
    %c0_6 = arith.constant 0 : index
    %7 = vector.load %arg2[%c0_4, %c0_5, %c0_6] : memref<2x16x32xf32, #tpu.memory_space<vmem>>, vector<1x16x32xf32>
    %8 = vector.shape_cast %7 : vector<1x16x32xf32> to vector<16x32xf32>
    %cst = arith.constant dense<0.000000e+00> : vector<16x32xf32>
    %9 = tpu.matmul %8, %3, %cst {dimension_numbers = #tpu.dot_dimension_numbers<[1], [0], [0], [1], [0, 0, 1, 1], [], []>} : vector<16x32xf32>, vector<32x32xf32>, vector<16x32xf32> -> vector<16x32xf32>
    %c0_7 = arith.constant 0 : index
    %c0_8 = arith.constant 0 : index
    %10 = vector.load %arg3[%c0_7, %c0_8] : memref<32x16xf32, #tpu.memory_space<vmem>>, vector<32x16xf32>
    %cst_9 = arith.constant dense<0.000000e+00> : vector<32x32xf32>
    %11 = tpu.matmul %10, %9, %cst_9 {dimension_numbers = #tpu.dot_dimension_numbers<[1], [0], [0], [1], [0, 0, 1, 1], [], []>} : vector<32x16xf32>, vector<16x32xf32>, vector<32x32xf32> -> vector<32x32xf32>
    %12 = vector.broadcast %6 : vector<1x32xf32> to vector<32x32xf32>
    %13 = arith.addf %11, %12 : vector<32x32xf32>
    %14 = math.absf %13 : vector<32x32xf32>
    %cst_10 = arith.constant 1.000000e+00 : f32
    %15 = vector.broadcast %cst_10 : f32 to vector<32x32xf32>
    %16 = arith.addf %15, %14 : vector<32x32xf32>
    %17 = tpu.reciprocal %16 {approx = true} : vector<32x32xf32> -> vector<32x32xf32>
    %18 = arith.mulf %13, %17 : vector<32x32xf32>
    %c1 = arith.constant 1 : index
    %19 = memref.load %arg1[%c1] : memref<2xi32, #tpu.memory_space<smem>>
    %20 = arith.index_cast %19 : i32 to index
    %c0_11 = arith.constant 0 : index
    %c0_12 = arith.constant 0 : index
    %21 = vector.load %arg4[%20, %c0_11, %c0_12] : memref<4x32x32xf32, #tpu.memory_space<vmem>>, vector<1x32x32xf32>
    %22 = vector.shape_cast %21 : vector<1x32x32xf32> to vector<32x32xf32>
    %23 = arith.index_cast %19 : i32 to index
    %c0_13 = arith.constant 0 : index
    %c0_14 = arith.constant 0 : index
    %24 = vector.load %arg5[%23, %c0_13, %c0_14] : memref<4x1x32xf32, #tpu.memory_space<vmem>>, vector<1x1x32xf32>
    %25 = vector.shape_cast %24 : vector<1x1x32xf32> to vector<1x32xf32>
    %c1_15 = arith.constant 1 : index
    %c0_16 = arith.constant 0 : index
    %c0_17 = arith.constant 0 : index
    %26 = vector.load %arg2[%c1_15, %c0_16, %c0_17] : memref<2x16x32xf32, #tpu.memory_space<vmem>>, vector<1x16x32xf32>
    %27 = vector.shape_cast %26 : vector<1x16x32xf32> to vector<16x32xf32>
    %cst_18 = arith.constant dense<0.000000e+00> : vector<16x32xf32>
    %28 = tpu.matmul %27, %22, %cst_18 {dimension_numbers = #tpu.dot_dimension_numbers<[1], [0], [0], [1], [0, 0, 1, 1], [], []>} : vector<16x32xf32>, vector<32x32xf32>, vector<16x32xf32> -> vector<16x32xf32>
    %c0_19 = arith.constant 0 : index
    %c0_20 = arith.constant 0 : index
    %29 = vector.load %arg3[%c0_19, %c0_20] : memref<32x16xf32, #tpu.memory_space<vmem>>, vector<32x16xf32>
    %cst_21 = arith.constant dense<0.000000e+00> : vector<32x32xf32>
    %30 = tpu.matmul %29, %28, %cst_21 {dimension_numbers = #tpu.dot_dimension_numbers<[1], [0], [0], [1], [0, 0, 1, 1], [], []>} : vector<32x16xf32>, vector<16x32xf32>, vector<32x32xf32> -> vector<32x32xf32>
    %31 = vector.broadcast %25 : vector<1x32xf32> to vector<32x32xf32>
    %32 = arith.addf %30, %31 : vector<32x32xf32>
    %33 = math.absf %32 : vector<32x32xf32>
    %cst_22 = arith.constant 1.000000e+00 : f32
    %34 = vector.broadcast %cst_22 : f32 to vector<32x32xf32>
    %35 = arith.addf %34, %33 : vector<32x32xf32>
    %36 = tpu.reciprocal %35 {approx = true} : vector<32x32xf32> -> vector<32x32xf32>
    %37 = arith.mulf %32, %36 : vector<32x32xf32>
    %c0_23 = arith.constant 0 : index
    %c0_24 = arith.constant 0 : index
    %38 = vector.load %arg7[%c0_23, %c0_24] : memref<1x128xf32, #tpu.memory_space<vmem>>, vector<1x128xf32>
    %39 = vector.extract_strided_slice %18 {offsets = [0, 0], sizes = [8, 32], strides = [1, 1]} : vector<32x32xf32> to vector<8x32xf32>
    %40 = vector.extract_strided_slice %37 {offsets = [0, 0], sizes = [8, 32], strides = [1, 1]} : vector<32x32xf32> to vector<8x32xf32>
    %41 = tpu.concatenate %39, %40 in 0 : vector<8x32xf32>, vector<8x32xf32> -> vector<16x32xf32>
    %c0_25 = arith.constant 0 : index
    %c0_26 = arith.constant 0 : index
    %c0_27 = arith.constant 0 : index
    %42 = vector.load %arg6[%c0_25, %c0_26, %c0_27] : memref<4x32x128xf32, #tpu.memory_space<vmem>>, vector<1x32x128xf32>
    %43 = vector.shape_cast %42 : vector<1x32x128xf32> to vector<32x128xf32>
    %cst_28 = arith.constant dense<0.000000e+00> : vector<16x128xf32>
    %44 = tpu.matmul %41, %43, %cst_28 {dimension_numbers = #tpu.dot_dimension_numbers<[1], [0], [0], [1], [0, 0, 1, 1], [], []>} : vector<16x32xf32>, vector<32x128xf32>, vector<16x128xf32> -> vector<16x128xf32>
    %45 = vector.broadcast %38 : vector<1x128xf32> to vector<16x128xf32>
    %46 = arith.addf %45, %44 : vector<16x128xf32>
    %47 = vector.extract_strided_slice %18 {offsets = [8, 0], sizes = [8, 32], strides = [1, 1]} : vector<32x32xf32> to vector<8x32xf32>
    %48 = vector.extract_strided_slice %37 {offsets = [8, 0], sizes = [8, 32], strides = [1, 1]} : vector<32x32xf32> to vector<8x32xf32>
    %49 = tpu.concatenate %47, %48 in 0 : vector<8x32xf32>, vector<8x32xf32> -> vector<16x32xf32>
    %c1_29 = arith.constant 1 : index
    %c0_30 = arith.constant 0 : index
    %c0_31 = arith.constant 0 : index
    %50 = vector.load %arg6[%c1_29, %c0_30, %c0_31] : memref<4x32x128xf32, #tpu.memory_space<vmem>>, vector<1x32x128xf32>
    %51 = vector.shape_cast %50 : vector<1x32x128xf32> to vector<32x128xf32>
    %cst_32 = arith.constant dense<0.000000e+00> : vector<16x128xf32>
    %52 = tpu.matmul %49, %51, %cst_32 {dimension_numbers = #tpu.dot_dimension_numbers<[1], [0], [0], [1], [0, 0, 1, 1], [], []>} : vector<16x32xf32>, vector<32x128xf32>, vector<16x128xf32> -> vector<16x128xf32>
    %53 = arith.addf %46, %52 : vector<16x128xf32>
    %54 = vector.extract_strided_slice %18 {offsets = [16, 0], sizes = [8, 32], strides = [1, 1]} : vector<32x32xf32> to vector<8x32xf32>
    %55 = vector.extract_strided_slice %37 {offsets = [16, 0], sizes = [8, 32], strides = [1, 1]} : vector<32x32xf32> to vector<8x32xf32>
    %56 = tpu.concatenate %54, %55 in 0 : vector<8x32xf32>, vector<8x32xf32> -> vector<16x32xf32>
    %c2 = arith.constant 2 : index
    %c0_33 = arith.constant 0 : index
    %c0_34 = arith.constant 0 : index
    %57 = vector.load %arg6[%c2, %c0_33, %c0_34] : memref<4x32x128xf32, #tpu.memory_space<vmem>>, vector<1x32x128xf32>
    %58 = vector.shape_cast %57 : vector<1x32x128xf32> to vector<32x128xf32>
    %cst_35 = arith.constant dense<0.000000e+00> : vector<16x128xf32>
    %59 = tpu.matmul %56, %58, %cst_35 {dimension_numbers = #tpu.dot_dimension_numbers<[1], [0], [0], [1], [0, 0, 1, 1], [], []>} : vector<16x32xf32>, vector<32x128xf32>, vector<16x128xf32> -> vector<16x128xf32>
    %60 = arith.addf %53, %59 : vector<16x128xf32>
    %61 = vector.extract_strided_slice %18 {offsets = [24, 0], sizes = [8, 32], strides = [1, 1]} : vector<32x32xf32> to vector<8x32xf32>
    %62 = vector.extract_strided_slice %37 {offsets = [24, 0], sizes = [8, 32], strides = [1, 1]} : vector<32x32xf32> to vector<8x32xf32>
    %63 = tpu.concatenate %61, %62 in 0 : vector<8x32xf32>, vector<8x32xf32> -> vector<16x32xf32>
    %c3 = arith.constant 3 : index
    %c0_36 = arith.constant 0 : index
    %c0_37 = arith.constant 0 : index
    %64 = vector.load %arg6[%c3, %c0_36, %c0_37] : memref<4x32x128xf32, #tpu.memory_space<vmem>>, vector<1x32x128xf32>
    %65 = vector.shape_cast %64 : vector<1x32x128xf32> to vector<32x128xf32>
    %cst_38 = arith.constant dense<0.000000e+00> : vector<16x128xf32>
    %66 = tpu.matmul %63, %65, %cst_38 {dimension_numbers = #tpu.dot_dimension_numbers<[1], [0], [0], [1], [0, 0, 1, 1], [], []>} : vector<16x32xf32>, vector<32x128xf32>, vector<16x128xf32> -> vector<16x128xf32>
    %67 = arith.addf %60, %66 : vector<16x128xf32>
    %c0_39 = arith.constant 0 : index
    %c0_40 = arith.constant 0 : index
    %68 = vector.load %arg8[%c0_39, %c0_40] : memref<32x128xf32, #tpu.memory_space<vmem>>, vector<32x128xf32>
    %c0_41 = arith.constant 0 : index
    %c0_42 = arith.constant 0 : index
    %69 = vector.load %arg9[%c0_41, %c0_42] : memref<1x128xf32, #tpu.memory_space<vmem>>, vector<1x128xf32>
    %cst_43 = arith.constant 0.000000e+00 : f32
    %70 = vector.broadcast %cst_43 : f32 to vector<16x32xf32>
    %c0_44 = arith.constant 0 : index
    %c0_45 = arith.constant 0 : index
    %71 = vector.load %arg13[%c0_44, %c0_45] : memref<16x32xf32, #tpu.memory_space<vmem>>, vector<16x32xf32>
    tpu.vector_store %arg13[%c0_44, %c0_45], %70 {strides = array<i32>} : memref<16x32xf32, #tpu.memory_space<vmem>>, vector<16x32xf32>,
    %72 = vector.extract_strided_slice %67 {offsets = [0, 0], sizes = [1, 128], strides = [1, 1]} : vector<16x128xf32> to vector<1x128xf32>
    %73 = vector.extract_strided_slice %67 {offsets = [8, 0], sizes = [1, 128], strides = [1, 1]} : vector<16x128xf32> to vector<1x128xf32>
    %74 = tpu.concatenate %72, %73 in 0 : vector<1x128xf32>, vector<1x128xf32> -> vector<2x128xf32>
    %75 = vector.extract_strided_slice %74 {offsets = [0, 0], sizes = [2, 32], strides = [1, 1]} : vector<2x128xf32> to vector<2x32xf32>
    %76 = vector.extract_strided_slice %69 {offsets = [0, 0], sizes = [1, 32], strides = [1, 1]} : vector<1x128xf32> to vector<1x32xf32>
    %77 = vector.broadcast %76 : vector<1x32xf32> to vector<2x32xf32>
    %78 = arith.addf %75, %77 : vector<2x32xf32>
    %79 = arith.negf %78 : vector<2x32xf32>
    %80 = math.exp %79 : vector<2x32xf32>
    %cst_46 = arith.constant 1.000000e+00 : f32
    %81 = vector.broadcast %cst_46 : f32 to vector<2x32xf32>
    %82 = arith.addf %81, %80 : vector<2x32xf32>
    %83 = arith.divf %81, %82 : vector<2x32xf32>
    %84 = vector.extract_strided_slice %74 {offsets = [0, 32], sizes = [2, 32], strides = [1, 1]} : vector<2x128xf32> to vector<2x32xf32>
    %85 = vector.extract_strided_slice %69 {offsets = [0, 32], sizes = [1, 32], strides = [1, 1]} : vector<1x128xf32> to vector<1x32xf32>
    %86 = vector.broadcast %85 : vector<1x32xf32> to vector<2x32xf32>
    %87 = arith.addf %84, %86 : vector<2x32xf32>
    %88 = arith.negf %87 : vector<2x32xf32>
    %89 = math.exp %88 : vector<2x32xf32>
    %cst_47 = arith.constant 1.000000e+00 : f32
    %90 = vector.broadcast %cst_47 : f32 to vector<2x32xf32>
    %91 = arith.addf %90, %89 : vector<2x32xf32>
    %92 = arith.divf %90, %91 : vector<2x32xf32>
    %93 = vector.extract_strided_slice %74 {offsets = [0, 64], sizes = [2, 32], strides = [1, 1]} : vector<2x128xf32> to vector<2x32xf32>
    %94 = vector.extract_strided_slice %69 {offsets = [0, 64], sizes = [1, 32], strides = [1, 1]} : vector<1x128xf32> to vector<1x32xf32>
    %95 = vector.broadcast %94 : vector<1x32xf32> to vector<2x32xf32>
    %96 = arith.mulf %83, %95 : vector<2x32xf32>
    %97 = arith.addf %93, %96 : vector<2x32xf32>
    %98 = math.tanh %97 : vector<2x32xf32>
    %cst_48 = arith.constant 1.000000e+00 : f32
    %99 = vector.broadcast %cst_48 : f32 to vector<2x32xf32>
    %100 = arith.subf %99, %92 : vector<2x32xf32>
    %101 = arith.mulf %100, %98 : vector<2x32xf32>
    %102 = vector.extract_strided_slice %101 {offsets = [0, 0], sizes = [1, 32], strides = [1, 1]} : vector<2x32xf32> to vector<1x32xf32>
    %c0_49 = arith.constant 0 : index
    %c0_50 = arith.constant 0 : index
    %103 = vector.load %arg13[%c0_49, %c0_50] : memref<16x32xf32, #tpu.memory_space<vmem>>, vector<1x32xf32>
    tpu.vector_store %arg13[%c0_49, %c0_50], %102 {strides = array<i32>} : memref<16x32xf32, #tpu.memory_space<vmem>>, vector<1x32xf32>,
    %104 = vector.extract_strided_slice %101 {offsets = [1, 0], sizes = [1, 32], strides = [1, 1]} : vector<2x32xf32> to vector<1x32xf32>
    %c8 = arith.constant 8 : index
    %c0_51 = arith.constant 0 : index
    %105 = vector.load %arg13[%c8, %c0_51] : memref<16x32xf32, #tpu.memory_space<vmem>>, vector<1x32xf32>
    tpu.vector_store %arg13[%c8, %c0_51], %104 {strides = array<i32>} : memref<16x32xf32, #tpu.memory_space<vmem>>, vector<1x32xf32>,
    %106 = vector.extract_strided_slice %67 {offsets = [1, 0], sizes = [1, 128], strides = [1, 1]} : vector<16x128xf32> to vector<1x128xf32>
    %107 = vector.extract_strided_slice %67 {offsets = [9, 0], sizes = [1, 128], strides = [1, 1]} : vector<16x128xf32> to vector<1x128xf32>
    %108 = tpu.concatenate %106, %107 in 0 : vector<1x128xf32>, vector<1x128xf32> -> vector<2x128xf32>
    %cst_52 = arith.constant dense<0.000000e+00> : vector<2x128xf32>
    %109 = tpu.matmul %101, %68, %cst_52 {dimension_numbers = #tpu.dot_dimension_numbers<[1], [0], [0], [1], [0, 0, 1, 1], [], []>} : vector<2x32xf32>, vector<32x128xf32>, vector<2x128xf32> -> vector<2x128xf32>
    %110 = vector.broadcast %69 : vector<1x128xf32> to vector<2x128xf32>
    %111 = arith.addf %109, %110 : vector<2x128xf32>
    %112 = vector.extract_strided_slice %108 {offsets = [0, 0], sizes = [2, 32], strides = [1, 1]} : vector<2x128xf32> to vector<2x32xf32>
    %113 = vector.extract_strided_slice %111 {offsets = [0, 0], sizes = [2, 32], strides = [1, 1]} : vector<2x128xf32> to vector<2x32xf32>
    %114 = arith.addf %112, %113 : vector<2x32xf32>
    %115 = arith.negf %114 : vector<2x32xf32>
    %116 = math.exp %115 : vector<2x32xf32>
    %cst_53 = arith.constant 1.000000e+00 : f32
    %117 = vector.broadcast %cst_53 : f32 to vector<2x32xf32>
    %118 = arith.addf %117, %116 : vector<2x32xf32>
    %119 = arith.divf %117, %118 : vector<2x32xf32>
    %120 = vector.extract_strided_slice %108 {offsets = [0, 32], sizes = [2, 32], strides = [1, 1]} : vector<2x128xf32> to vector<2x32xf32>
    %121 = vector.extract_strided_slice %111 {offsets = [0, 32], sizes = [2, 32], strides = [1, 1]} : vector<2x128xf32> to vector<2x32xf32>
    %122 = arith.addf %120, %121 : vector<2x32xf32>
    %123 = arith.negf %122 : vector<2x32xf32>
    %124 = math.exp %123 : vector<2x32xf32>
    %cst_54 = arith.constant 1.000000e+00 : f32
    %125 = vector.broadcast %cst_54 : f32 to vector<2x32xf32>
    %126 = arith.addf %125, %124 : vector<2x32xf32>
    %127 = arith.divf %125, %126 : vector<2x32xf32>
    %128 = vector.extract_strided_slice %108 {offsets = [0, 64], sizes = [2, 32], strides = [1, 1]} : vector<2x128xf32> to vector<2x32xf32>
    %129 = vector.extract_strided_slice %111 {offsets = [0, 64], sizes = [2, 32], strides = [1, 1]} : vector<2x128xf32> to vector<2x32xf32>
    %130 = arith.mulf %119, %129 : vector<2x32xf32>
    %131 = arith.addf %128, %130 : vector<2x32xf32>
    %132 = math.tanh %131 : vector<2x32xf32>
    %cst_55 = arith.constant 1.000000e+00 : f32
    %133 = vector.broadcast %cst_55 : f32 to vector<2x32xf32>
    %134 = arith.subf %133, %127 : vector<2x32xf32>
    %135 = arith.mulf %134, %132 : vector<2x32xf32>
    %136 = arith.mulf %127, %101 : vector<2x32xf32>
    %137 = arith.addf %135, %136 : vector<2x32xf32>
    %138 = vector.extract_strided_slice %137 {offsets = [0, 0], sizes = [1, 32], strides = [1, 1]} : vector<2x32xf32> to vector<1x32xf32>
    %c1_56 = arith.constant 1 : index
    %c0_57 = arith.constant 0 : index
    %139 = vector.load %arg13[%c1_56, %c0_57] : memref<16x32xf32, #tpu.memory_space<vmem>>, vector<1x32xf32>
    tpu.vector_store %arg13[%c1_56, %c0_57], %138 {strides = array<i32>} : memref<16x32xf32, #tpu.memory_space<vmem>>, vector<1x32xf32>,
    %140 = vector.extract_strided_slice %137 {offsets = [1, 0], sizes = [1, 32], strides = [1, 1]} : vector<2x32xf32> to vector<1x32xf32>
    %c9 = arith.constant 9 : index
    %c0_58 = arith.constant 0 : index
    %141 = vector.load %arg13[%c9, %c0_58] : memref<16x32xf32, #tpu.memory_space<vmem>>, vector<1x32xf32>
    tpu.vector_store %arg13[%c9, %c0_58], %140 {strides = array<i32>} : memref<16x32xf32, #tpu.memory_space<vmem>>, vector<1x32xf32>,
    %142 = vector.extract_strided_slice %67 {offsets = [2, 0], sizes = [1, 128], strides = [1, 1]} : vector<16x128xf32> to vector<1x128xf32>
    %143 = vector.extract_strided_slice %67 {offsets = [10, 0], sizes = [1, 128], strides = [1, 1]} : vector<16x128xf32> to vector<1x128xf32>
    %144 = tpu.concatenate %142, %143 in 0 : vector<1x128xf32>, vector<1x128xf32> -> vector<2x128xf32>
    %cst_59 = arith.constant dense<0.000000e+00> : vector<2x128xf32>
    %145 = tpu.matmul %137, %68, %cst_59 {dimension_numbers = #tpu.dot_dimension_numbers<[1], [0], [0], [1], [0, 0, 1, 1], [], []>} : vector<2x32xf32>, vector<32x128xf32>, vector<2x128xf32> -> vector<2x128xf32>
    %146 = vector.broadcast %69 : vector<1x128xf32> to vector<2x128xf32>
    %147 = arith.addf %145, %146 : vector<2x128xf32>
    %148 = vector.extract_strided_slice %144 {offsets = [0, 0], sizes = [2, 32], strides = [1, 1]} : vector<2x128xf32> to vector<2x32xf32>
    %149 = vector.extract_strided_slice %147 {offsets = [0, 0], sizes = [2, 32], strides = [1, 1]} : vector<2x128xf32> to vector<2x32xf32>
    %150 = arith.addf %148, %149 : vector<2x32xf32>
    %151 = arith.negf %150 : vector<2x32xf32>
    %152 = math.exp %151 : vector<2x32xf32>
    %cst_60 = arith.constant 1.000000e+00 : f32
    %153 = vector.broadcast %cst_60 : f32 to vector<2x32xf32>
    %154 = arith.addf %153, %152 : vector<2x32xf32>
    %155 = arith.divf %153, %154 : vector<2x32xf32>
    %156 = vector.extract_strided_slice %144 {offsets = [0, 32], sizes = [2, 32], strides = [1, 1]} : vector<2x128xf32> to vector<2x32xf32>
    %157 = vector.extract_strided_slice %147 {offsets = [0, 32], sizes = [2, 32], strides = [1, 1]} : vector<2x128xf32> to vector<2x32xf32>
    %158 = arith.addf %156, %157 : vector<2x32xf32>
    %159 = arith.negf %158 : vector<2x32xf32>
    %160 = math.exp %159 : vector<2x32xf32>
    %cst_61 = arith.constant 1.000000e+00 : f32
    %161 = vector.broadcast %cst_61 : f32 to vector<2x32xf32>
    %162 = arith.addf %161, %160 : vector<2x32xf32>
    %163 = arith.divf %161, %162 : vector<2x32xf32>
    %164 = vector.extract_strided_slice %144 {offsets = [0, 64], sizes = [2, 32], strides = [1, 1]} : vector<2x128xf32> to vector<2x32xf32>
    %165 = vector.extract_strided_slice %147 {offsets = [0, 64], sizes = [2, 32], strides = [1, 1]} : vector<2x128xf32> to vector<2x32xf32>
    %166 = arith.mulf %155, %165 : vector<2x32xf32>
    %167 = arith.addf %164, %166 : vector<2x32xf32>
    %168 = math.tanh %167 : vector<2x32xf32>
    %cst_62 = arith.constant 1.000000e+00 : f32
    %169 = vector.broadcast %cst_62 : f32 to vector<2x32xf32>
    %170 = arith.subf %169, %163 : vector<2x32xf32>
    %171 = arith.mulf %170, %168 : vector<2x32xf32>
    %172 = arith.mulf %163, %137 : vector<2x32xf32>
    %173 = arith.addf %171, %172 : vector<2x32xf32>
    %174 = vector.extract_strided_slice %173 {offsets = [0, 0], sizes = [1, 32], strides = [1, 1]} : vector<2x32xf32> to vector<1x32xf32>
    %c2_63 = arith.constant 2 : index
    %c0_64 = arith.constant 0 : index
    %175 = vector.load %arg13[%c2_63, %c0_64] : memref<16x32xf32, #tpu.memory_space<vmem>>, vector<1x32xf32>
    tpu.vector_store %arg13[%c2_63, %c0_64], %174 {strides = array<i32>} : memref<16x32xf32, #tpu.memory_space<vmem>>, vector<1x32xf32>,
    %176 = vector.extract_strided_slice %173 {offsets = [1, 0], sizes = [1, 32], strides = [1, 1]} : vector<2x32xf32> to vector<1x32xf32>
    %c10 = arith.constant 10 : index
    %c0_65 = arith.constant 0 : index
    %177 = vector.load %arg13[%c10, %c0_65] : memref<16x32xf32, #tpu.memory_space<vmem>>, vector<1x32xf32>
    tpu.vector_store %arg13[%c10, %c0_65], %176 {strides = array<i32>} : memref<16x32xf32, #tpu.memory_space<vmem>>, vector<1x32xf32>,
    %178 = vector.extract_strided_slice %67 {offsets = [3, 0], sizes = [1, 128], strides = [1, 1]} : vector<16x128xf32> to vector<1x128xf32>
    %179 = vector.extract_strided_slice %67 {offsets = [11, 0], sizes = [1, 128], strides = [1, 1]} : vector<16x128xf32> to vector<1x128xf32>
    %180 = tpu.concatenate %178, %179 in 0 : vector<1x128xf32>, vector<1x128xf32> -> vector<2x128xf32>
    %cst_66 = arith.constant dense<0.000000e+00> : vector<2x128xf32>
    %181 = tpu.matmul %173, %68, %cst_66 {dimension_numbers = #tpu.dot_dimension_numbers<[1], [0], [0], [1], [0, 0, 1, 1], [], []>} : vector<2x32xf32>, vector<32x128xf32>, vector<2x128xf32> -> vector<2x128xf32>
    %182 = vector.broadcast %69 : vector<1x128xf32> to vector<2x128xf32>
    %183 = arith.addf %181, %182 : vector<2x128xf32>
    %184 = vector.extract_strided_slice %180 {offsets = [0, 0], sizes = [2, 32], strides = [1, 1]} : vector<2x128xf32> to vector<2x32xf32>
    %185 = vector.extract_strided_slice %183 {offsets = [0, 0], sizes = [2, 32], strides = [1, 1]} : vector<2x128xf32> to vector<2x32xf32>
    %186 = arith.addf %184, %185 : vector<2x32xf32>
    %187 = arith.negf %186 : vector<2x32xf32>
    %188 = math.exp %187 : vector<2x32xf32>
    %cst_67 = arith.constant 1.000000e+00 : f32
    %189 = vector.broadcast %cst_67 : f32 to vector<2x32xf32>
    %190 = arith.addf %189, %188 : vector<2x32xf32>
    %191 = arith.divf %189, %190 : vector<2x32xf32>
    %192 = vector.extract_strided_slice %180 {offsets = [0, 32], sizes = [2, 32], strides = [1, 1]} : vector<2x128xf32> to vector<2x32xf32>
    %193 = vector.extract_strided_slice %183 {offsets = [0, 32], sizes = [2, 32], strides = [1, 1]} : vector<2x128xf32> to vector<2x32xf32>
    %194 = arith.addf %192, %193 : vector<2x32xf32>
    %195 = arith.negf %194 : vector<2x32xf32>
    %196 = math.exp %195 : vector<2x32xf32>
    %cst_68 = arith.constant 1.000000e+00 : f32
    %197 = vector.broadcast %cst_68 : f32 to vector<2x32xf32>
    %198 = arith.addf %197, %196 : vector<2x32xf32>
    %199 = arith.divf %197, %198 : vector<2x32xf32>
    %200 = vector.extract_strided_slice %180 {offsets = [0, 64], sizes = [2, 32], strides = [1, 1]} : vector<2x128xf32> to vector<2x32xf32>
    %201 = vector.extract_strided_slice %183 {offsets = [0, 64], sizes = [2, 32], strides = [1, 1]} : vector<2x128xf32> to vector<2x32xf32>
    %202 = arith.mulf %191, %201 : vector<2x32xf32>
    %203 = arith.addf %200, %202 : vector<2x32xf32>
    %204 = math.tanh %203 : vector<2x32xf32>
    %cst_69 = arith.constant 1.000000e+00 : f32
    %205 = vector.broadcast %cst_69 : f32 to vector<2x32xf32>
    %206 = arith.subf %205, %199 : vector<2x32xf32>
    %207 = arith.mulf %206, %204 : vector<2x32xf32>
    %208 = arith.mulf %199, %173 : vector<2x32xf32>
    %209 = arith.addf %207, %208 : vector<2x32xf32>
    %210 = vector.extract_strided_slice %209 {offsets = [0, 0], sizes = [1, 32], strides = [1, 1]} : vector<2x32xf32> to vector<1x32xf32>
    %c3_70 = arith.constant 3 : index
    %c0_71 = arith.constant 0 : index
    %211 = vector.load %arg13[%c3_70, %c0_71] : memref<16x32xf32, #tpu.memory_space<vmem>>, vector<1x32xf32>
    tpu.vector_store %arg13[%c3_70, %c0_71], %210 {strides = array<i32>} : memref<16x32xf32, #tpu.memory_space<vmem>>, vector<1x32xf32>,
    %212 = vector.extract_strided_slice %209 {offsets = [1, 0], sizes = [1, 32], strides = [1, 1]} : vector<2x32xf32> to vector<1x32xf32>
    %c11 = arith.constant 11 : index
    %c0_72 = arith.constant 0 : index
    %213 = vector.load %arg13[%c11, %c0_72] : memref<16x32xf32, #tpu.memory_space<vmem>>, vector<1x32xf32>
    tpu.vector_store %arg13[%c11, %c0_72], %212 {strides = array<i32>} : memref<16x32xf32, #tpu.memory_space<vmem>>, vector<1x32xf32>,
    %214 = vector.extract_strided_slice %67 {offsets = [4, 0], sizes = [1, 128], strides = [1, 1]} : vector<16x128xf32> to vector<1x128xf32>
    %215 = vector.extract_strided_slice %67 {offsets = [12, 0], sizes = [1, 128], strides = [1, 1]} : vector<16x128xf32> to vector<1x128xf32>
    %216 = tpu.concatenate %214, %215 in 0 : vector<1x128xf32>, vector<1x128xf32> -> vector<2x128xf32>
    %cst_73 = arith.constant dense<0.000000e+00> : vector<2x128xf32>
    %217 = tpu.matmul %209, %68, %cst_73 {dimension_numbers = #tpu.dot_dimension_numbers<[1], [0], [0], [1], [0, 0, 1, 1], [], []>} : vector<2x32xf32>, vector<32x128xf32>, vector<2x128xf32> -> vector<2x128xf32>
    %218 = vector.broadcast %69 : vector<1x128xf32> to vector<2x128xf32>
    %219 = arith.addf %217, %218 : vector<2x128xf32>
    %220 = vector.extract_strided_slice %216 {offsets = [0, 0], sizes = [2, 32], strides = [1, 1]} : vector<2x128xf32> to vector<2x32xf32>
    %221 = vector.extract_strided_slice %219 {offsets = [0, 0], sizes = [2, 32], strides = [1, 1]} : vector<2x128xf32> to vector<2x32xf32>
    %222 = arith.addf %220, %221 : vector<2x32xf32>
    %223 = arith.negf %222 : vector<2x32xf32>
    %224 = math.exp %223 : vector<2x32xf32>
    %cst_74 = arith.constant 1.000000e+00 : f32
    %225 = vector.broadcast %cst_74 : f32 to vector<2x32xf32>
    %226 = arith.addf %225, %224 : vector<2x32xf32>
    %227 = arith.divf %225, %226 : vector<2x32xf32>
    %228 = vector.extract_strided_slice %216 {offsets = [0, 32], sizes = [2, 32], strides = [1, 1]} : vector<2x128xf32> to vector<2x32xf32>
    %229 = vector.extract_strided_slice %219 {offsets = [0, 32], sizes = [2, 32], strides = [1, 1]} : vector<2x128xf32> to vector<2x32xf32>
    %230 = arith.addf %228, %229 : vector<2x32xf32>
    %231 = arith.negf %230 : vector<2x32xf32>
    %232 = math.exp %231 : vector<2x32xf32>
    %cst_75 = arith.constant 1.000000e+00 : f32
    %233 = vector.broadcast %cst_75 : f32 to vector<2x32xf32>
    %234 = arith.addf %233, %232 : vector<2x32xf32>
    %235 = arith.divf %233, %234 : vector<2x32xf32>
    %236 = vector.extract_strided_slice %216 {offsets = [0, 64], sizes = [2, 32], strides = [1, 1]} : vector<2x128xf32> to vector<2x32xf32>
    %237 = vector.extract_strided_slice %219 {offsets = [0, 64], sizes = [2, 32], strides = [1, 1]} : vector<2x128xf32> to vector<2x32xf32>
    %238 = arith.mulf %227, %237 : vector<2x32xf32>
    %239 = arith.addf %236, %238 : vector<2x32xf32>
    %240 = math.tanh %239 : vector<2x32xf32>
    %cst_76 = arith.constant 1.000000e+00 : f32
    %241 = vector.broadcast %cst_76 : f32 to vector<2x32xf32>
    %242 = arith.subf %241, %235 : vector<2x32xf32>
    %243 = arith.mulf %242, %240 : vector<2x32xf32>
    %244 = arith.mulf %235, %209 : vector<2x32xf32>
    %245 = arith.addf %243, %244 : vector<2x32xf32>
    %246 = vector.extract_strided_slice %245 {offsets = [0, 0], sizes = [1, 32], strides = [1, 1]} : vector<2x32xf32> to vector<1x32xf32>
    %c4 = arith.constant 4 : index
    %c0_77 = arith.constant 0 : index
    %247 = vector.load %arg13[%c4, %c0_77] : memref<16x32xf32, #tpu.memory_space<vmem>>, vector<1x32xf32>
    tpu.vector_store %arg13[%c4, %c0_77], %246 {strides = array<i32>} : memref<16x32xf32, #tpu.memory_space<vmem>>, vector<1x32xf32>,
    %248 = vector.extract_strided_slice %245 {offsets = [1, 0], sizes = [1, 32], strides = [1, 1]} : vector<2x32xf32> to vector<1x32xf32>
    %c12 = arith.constant 12 : index
    %c0_78 = arith.constant 0 : index
    %249 = vector.load %arg13[%c12, %c0_78] : memref<16x32xf32, #tpu.memory_space<vmem>>, vector<1x32xf32>
    tpu.vector_store %arg13[%c12, %c0_78], %248 {strides = array<i32>} : memref<16x32xf32, #tpu.memory_space<vmem>>, vector<1x32xf32>,
    %250 = vector.extract_strided_slice %67 {offsets = [5, 0], sizes = [1, 128], strides = [1, 1]} : vector<16x128xf32> to vector<1x128xf32>
    %251 = vector.extract_strided_slice %67 {offsets = [13, 0], sizes = [1, 128], strides = [1, 1]} : vector<16x128xf32> to vector<1x128xf32>
    %252 = tpu.concatenate %250, %251 in 0 : vector<1x128xf32>, vector<1x128xf32> -> vector<2x128xf32>
    %cst_79 = arith.constant dense<0.000000e+00> : vector<2x128xf32>
    %253 = tpu.matmul %245, %68, %cst_79 {dimension_numbers = #tpu.dot_dimension_numbers<[1], [0], [0], [1], [0, 0, 1, 1], [], []>} : vector<2x32xf32>, vector<32x128xf32>, vector<2x128xf32> -> vector<2x128xf32>
    %254 = vector.broadcast %69 : vector<1x128xf32> to vector<2x128xf32>
    %255 = arith.addf %253, %254 : vector<2x128xf32>
    %256 = vector.extract_strided_slice %252 {offsets = [0, 0], sizes = [2, 32], strides = [1, 1]} : vector<2x128xf32> to vector<2x32xf32>
    %257 = vector.extract_strided_slice %255 {offsets = [0, 0], sizes = [2, 32], strides = [1, 1]} : vector<2x128xf32> to vector<2x32xf32>
    %258 = arith.addf %256, %257 : vector<2x32xf32>
    %259 = arith.negf %258 : vector<2x32xf32>
    %260 = math.exp %259 : vector<2x32xf32>
    %cst_80 = arith.constant 1.000000e+00 : f32
    %261 = vector.broadcast %cst_80 : f32 to vector<2x32xf32>
    %262 = arith.addf %261, %260 : vector<2x32xf32>
    %263 = arith.divf %261, %262 : vector<2x32xf32>
    %264 = vector.extract_strided_slice %252 {offsets = [0, 32], sizes = [2, 32], strides = [1, 1]} : vector<2x128xf32> to vector<2x32xf32>
    %265 = vector.extract_strided_slice %255 {offsets = [0, 32], sizes = [2, 32], strides = [1, 1]} : vector<2x128xf32> to vector<2x32xf32>
    %266 = arith.addf %264, %265 : vector<2x32xf32>
    %267 = arith.negf %266 : vector<2x32xf32>
    %268 = math.exp %267 : vector<2x32xf32>
    %cst_81 = arith.constant 1.000000e+00 : f32
    %269 = vector.broadcast %cst_81 : f32 to vector<2x32xf32>
    %270 = arith.addf %269, %268 : vector<2x32xf32>
    %271 = arith.divf %269, %270 : vector<2x32xf32>
    %272 = vector.extract_strided_slice %252 {offsets = [0, 64], sizes = [2, 32], strides = [1, 1]} : vector<2x128xf32> to vector<2x32xf32>
    %273 = vector.extract_strided_slice %255 {offsets = [0, 64], sizes = [2, 32], strides = [1, 1]} : vector<2x128xf32> to vector<2x32xf32>
    %274 = arith.mulf %263, %273 : vector<2x32xf32>
    %275 = arith.addf %272, %274 : vector<2x32xf32>
    %276 = math.tanh %275 : vector<2x32xf32>
    %cst_82 = arith.constant 1.000000e+00 : f32
    %277 = vector.broadcast %cst_82 : f32 to vector<2x32xf32>
    %278 = arith.subf %277, %271 : vector<2x32xf32>
    %279 = arith.mulf %278, %276 : vector<2x32xf32>
    %280 = arith.mulf %271, %245 : vector<2x32xf32>
    %281 = arith.addf %279, %280 : vector<2x32xf32>
    %282 = vector.extract_strided_slice %281 {offsets = [0, 0], sizes = [1, 32], strides = [1, 1]} : vector<2x32xf32> to vector<1x32xf32>
    %c5 = arith.constant 5 : index
    %c0_83 = arith.constant 0 : index
    %283 = vector.load %arg13[%c5, %c0_83] : memref<16x32xf32, #tpu.memory_space<vmem>>, vector<1x32xf32>
    tpu.vector_store %arg13[%c5, %c0_83], %282 {strides = array<i32>} : memref<16x32xf32, #tpu.memory_space<vmem>>, vector<1x32xf32>,
    %284 = vector.extract_strided_slice %281 {offsets = [1, 0], sizes = [1, 32], strides = [1, 1]} : vector<2x32xf32> to vector<1x32xf32>
    %c13 = arith.constant 13 : index
    %c0_84 = arith.constant 0 : index
    %285 = vector.load %arg13[%c13, %c0_84] : memref<16x32xf32, #tpu.memory_space<vmem>>, vector<1x32xf32>
    tpu.vector_store %arg13[%c13, %c0_84], %284 {strides = array<i32>} : memref<16x32xf32, #tpu.memory_space<vmem>>, vector<1x32xf32>,
    %286 = vector.extract_strided_slice %67 {offsets = [6, 0], sizes = [1, 128], strides = [1, 1]} : vector<16x128xf32> to vector<1x128xf32>
    %287 = vector.extract_strided_slice %67 {offsets = [14, 0], sizes = [1, 128], strides = [1, 1]} : vector<16x128xf32> to vector<1x128xf32>
    %288 = tpu.concatenate %286, %287 in 0 : vector<1x128xf32>, vector<1x128xf32> -> vector<2x128xf32>
    %cst_85 = arith.constant dense<0.000000e+00> : vector<2x128xf32>
    %289 = tpu.matmul %281, %68, %cst_85 {dimension_numbers = #tpu.dot_dimension_numbers<[1], [0], [0], [1], [0, 0, 1, 1], [], []>} : vector<2x32xf32>, vector<32x128xf32>, vector<2x128xf32> -> vector<2x128xf32>
    %290 = vector.broadcast %69 : vector<1x128xf32> to vector<2x128xf32>
    %291 = arith.addf %289, %290 : vector<2x128xf32>
    %292 = vector.extract_strided_slice %288 {offsets = [0, 0], sizes = [2, 32], strides = [1, 1]} : vector<2x128xf32> to vector<2x32xf32>
    %293 = vector.extract_strided_slice %291 {offsets = [0, 0], sizes = [2, 32], strides = [1, 1]} : vector<2x128xf32> to vector<2x32xf32>
    %294 = arith.addf %292, %293 : vector<2x32xf32>
    %295 = arith.negf %294 : vector<2x32xf32>
    %296 = math.exp %295 : vector<2x32xf32>
    %cst_86 = arith.constant 1.000000e+00 : f32
    %297 = vector.broadcast %cst_86 : f32 to vector<2x32xf32>
    %298 = arith.addf %297, %296 : vector<2x32xf32>
    %299 = arith.divf %297, %298 : vector<2x32xf32>
    %300 = vector.extract_strided_slice %288 {offsets = [0, 32], sizes = [2, 32], strides = [1, 1]} : vector<2x128xf32> to vector<2x32xf32>
    %301 = vector.extract_strided_slice %291 {offsets = [0, 32], sizes = [2, 32], strides = [1, 1]} : vector<2x128xf32> to vector<2x32xf32>
    %302 = arith.addf %300, %301 : vector<2x32xf32>
    %303 = arith.negf %302 : vector<2x32xf32>
    %304 = math.exp %303 : vector<2x32xf32>
    %cst_87 = arith.constant 1.000000e+00 : f32
    %305 = vector.broadcast %cst_87 : f32 to vector<2x32xf32>
    %306 = arith.addf %305, %304 : vector<2x32xf32>
    %307 = arith.divf %305, %306 : vector<2x32xf32>
    %308 = vector.extract_strided_slice %288 {offsets = [0, 64], sizes = [2, 32], strides = [1, 1]} : vector<2x128xf32> to vector<2x32xf32>
    %309 = vector.extract_strided_slice %291 {offsets = [0, 64], sizes = [2, 32], strides = [1, 1]} : vector<2x128xf32> to vector<2x32xf32>
    %310 = arith.mulf %299, %309 : vector<2x32xf32>
    %311 = arith.addf %308, %310 : vector<2x32xf32>
    %312 = math.tanh %311 : vector<2x32xf32>
    %cst_88 = arith.constant 1.000000e+00 : f32
    %313 = vector.broadcast %cst_88 : f32 to vector<2x32xf32>
    %314 = arith.subf %313, %307 : vector<2x32xf32>
    %315 = arith.mulf %314, %312 : vector<2x32xf32>
    %316 = arith.mulf %307, %281 : vector<2x32xf32>
    %317 = arith.addf %315, %316 : vector<2x32xf32>
    %318 = vector.extract_strided_slice %317 {offsets = [0, 0], sizes = [1, 32], strides = [1, 1]} : vector<2x32xf32> to vector<1x32xf32>
    %c6 = arith.constant 6 : index
    %c0_89 = arith.constant 0 : index
    %319 = vector.load %arg13[%c6, %c0_89] : memref<16x32xf32, #tpu.memory_space<vmem>>, vector<1x32xf32>
    tpu.vector_store %arg13[%c6, %c0_89], %318 {strides = array<i32>} : memref<16x32xf32, #tpu.memory_space<vmem>>, vector<1x32xf32>,
    %320 = vector.extract_strided_slice %317 {offsets = [1, 0], sizes = [1, 32], strides = [1, 1]} : vector<2x32xf32> to vector<1x32xf32>
    %c14 = arith.constant 14 : index
    %c0_90 = arith.constant 0 : index
    %321 = vector.load %arg13[%c14, %c0_90] : memref<16x32xf32, #tpu.memory_space<vmem>>, vector<1x32xf32>
    tpu.vector_store %arg13[%c14, %c0_90], %320 {strides = array<i32>} : memref<16x32xf32, #tpu.memory_space<vmem>>, vector<1x32xf32>,
    %c0_91 = arith.constant 0 : index
    %c0_92 = arith.constant 0 : index
    %322 = vector.load %arg13[%c0_91, %c0_92] : memref<16x32xf32, #tpu.memory_space<vmem>>, vector<16x32xf32>
    %c0_93 = arith.constant 0 : index
    %c0_94 = arith.constant 0 : index
    %323 = vector.load %arg10[%c0_93, %c0_94] : memref<32x128xf32, #tpu.memory_space<vmem>>, vector<32x128xf32>
    %cst_95 = arith.constant dense<0.000000e+00> : vector<16x128xf32>
    %324 = tpu.matmul %322, %323, %cst_95 {dimension_numbers = #tpu.dot_dimension_numbers<[1], [0], [0], [1], [0, 0, 1, 1], [], []>} : vector<16x32xf32>, vector<32x128xf32>, vector<16x128xf32> -> vector<16x128xf32>
    %c0_96 = arith.constant 0 : index
    %c0_97 = arith.constant 0 : index
    %325 = vector.load %arg11[%c0_96, %c0_97] : memref<1x128xf32, #tpu.memory_space<vmem>>, vector<1x128xf32>
    %326 = vector.broadcast %325 : vector<1x128xf32> to vector<16x128xf32>
    %327 = arith.addf %324, %326 : vector<16x128xf32>
    %328 = vector.extract_strided_slice %327 {offsets = [0, 0], sizes = [8, 128], strides = [1, 1]} : vector<16x128xf32> to vector<8x128xf32>
    %c0_98 = arith.constant 0 : index
    %c0_99 = arith.constant 0 : index
    %c0_100 = arith.constant 0 : index
    %329 = vector.load %arg12[%c0_98, %c0_99, %c0_100] : memref<2x8x128xf32, #tpu.memory_space<vmem>>, vector<1x8x128xf32>
    %330 = vector.shape_cast %329 : vector<1x8x128xf32> to vector<8x128xf32>
    %331 = vector.shape_cast %328 : vector<8x128xf32> to vector<1x8x128xf32>
    tpu.vector_store %arg12[%c0_98, %c0_99, %c0_100], %331 {strides = array<i32>} : memref<2x8x128xf32, #tpu.memory_space<vmem>>, vector<1x8x128xf32>,
    %332 = vector.extract_strided_slice %327 {offsets = [8, 0], sizes = [8, 128], strides = [1, 1]} : vector<16x128xf32> to vector<8x128xf32>
    %c1_101 = arith.constant 1 : index
    %c0_102 = arith.constant 0 : index
    %c0_103 = arith.constant 0 : index
    %333 = vector.load %arg12[%c1_101, %c0_102, %c0_103] : memref<2x8x128xf32, #tpu.memory_space<vmem>>, vector<1x8x128xf32>
    %334 = vector.shape_cast %333 : vector<1x8x128xf32> to vector<8x128xf32>
    %335 = vector.shape_cast %332 : vector<8x128xf32> to vector<1x8x128xf32>
    tpu.vector_store %arg12[%c1_101, %c0_102, %c0_103], %335 {strides = array<i32>} : memref<2x8x128xf32, #tpu.memory_space<vmem>>, vector<1x8x128xf32>,
    return
  }
  func.func @transform_0(%arg0: i32, %arg1: memref<2xi32, #tpu.memory_space<smem>>) -> (i32, i32, i32) {
    %c0_i32 = arith.constant 0 : i32
    %c0_i32_0 = arith.constant 0 : i32
    %c0_i32_1 = arith.constant 0 : i32
    %c0_i32_2 = arith.constant 0 : i32
    return %c0_i32, %c0_i32_0, %c0_i32_1 : i32, i32, i32
  }
  func.func @transform_1(%arg0: i32, %arg1: memref<2xi32, #tpu.memory_space<smem>>) -> (i32, i32) {
    %c0_i32 = arith.constant 0 : i32
    %c0_i32_0 = arith.constant 0 : i32
    %c0_i32_1 = arith.constant 0 : i32
    return %c0_i32, %c0_i32_0 : i32, i32
  }
  func.func @transform_2(%arg0: i32, %arg1: memref<2xi32, #tpu.memory_space<smem>>) -> (i32, i32, i32) {
    %c0_i32 = arith.constant 0 : i32
    %c0_i32_0 = arith.constant 0 : i32
    %c0_i32_1 = arith.constant 0 : i32
    %c0_i32_2 = arith.constant 0 : i32
    return %c0_i32, %c0_i32_0, %c0_i32_1 : i32, i32, i32
  }
  func.func @transform_3(%arg0: i32, %arg1: memref<2xi32, #tpu.memory_space<smem>>) -> (i32, i32, i32) {
    %c0_i32 = arith.constant 0 : i32
    %c0_i32_0 = arith.constant 0 : i32
    %c0_i32_1 = arith.constant 0 : i32
    %c0_i32_2 = arith.constant 0 : i32
    return %c0_i32, %c0_i32_0, %c0_i32_1 : i32, i32, i32
  }
  func.func @transform_4(%arg0: i32, %arg1: memref<2xi32, #tpu.memory_space<smem>>) -> (i32, i32, i32) {
    %c0_i32 = arith.constant 0 : i32
    %c0_i32_0 = arith.constant 0 : i32
    %c0_i32_1 = arith.constant 0 : i32
    %c0_i32_2 = arith.constant 0 : i32
    return %c0_i32, %c0_i32_0, %c0_i32_1 : i32, i32, i32
  }
  func.func @transform_5(%arg0: i32, %arg1: memref<2xi32, #tpu.memory_space<smem>>) -> (i32, i32) {
    %c0_i32 = arith.constant 0 : i32
    %c0_i32_0 = arith.constant 0 : i32
    %c0_i32_1 = arith.constant 0 : i32
    return %c0_i32, %c0_i32_0 : i32, i32
  }
  func.func @transform_6(%arg0: i32, %arg1: memref<2xi32, #tpu.memory_space<smem>>) -> (i32, i32) {
    %c0_i32 = arith.constant 0 : i32
    %c0_i32_0 = arith.constant 0 : i32
    %c0_i32_1 = arith.constant 0 : i32
    return %c0_i32, %c0_i32_0 : i32, i32
  }
  func.func @transform_7(%arg0: i32, %arg1: memref<2xi32, #tpu.memory_space<smem>>) -> (i32, i32) {
    %c0_i32 = arith.constant 0 : i32
    %c0_i32_0 = arith.constant 0 : i32
    %c0_i32_1 = arith.constant 0 : i32
    return %c0_i32, %c0_i32_0 : i32, i32
  }
  func.func @transform_8(%arg0: i32, %arg1: memref<2xi32, #tpu.memory_space<smem>>) -> (i32, i32) {
    %c0_i32 = arith.constant 0 : i32
    %c0_i32_0 = arith.constant 0 : i32
    %c0_i32_1 = arith.constant 0 : i32
    return %c0_i32, %c0_i32_0 : i32, i32
  }
  func.func @transform_9(%arg0: i32, %arg1: memref<2xi32, #tpu.memory_space<smem>>) -> (i32, i32) {
    %c0_i32 = arith.constant 0 : i32
    %c0_i32_0 = arith.constant 0 : i32
    %c0_i32_1 = arith.constant 0 : i32
    return %c0_i32, %c0_i32_0 : i32, i32
  }
  func.func @transform_10(%arg0: i32, %arg1: memref<2xi32, #tpu.memory_space<smem>>) -> (i32, i32, i32) {
    %c0_i32 = arith.constant 0 : i32
    %c0_i32_0 = arith.constant 0 : i32
    %c0_i32_1 = arith.constant 0 : i32
    %c0_i32_2 = arith.constant 0 : i32
    return %c0_i32, %c0_i32_0, %c0_i32_1 : i32, i32, i32
  }
}

</mosaic_0001>

<llo_original>
// kernel: model_wrapper_forward.1
$region0: #{model_wrapper_forward.1}
  #allocation0 [shape = 'u32[]', space=smem, size = 0x4, offset = 0x4, fixed_abs, tag = 'smem constant byte address 0x4 - core index']
  #allocation1 [shape = 'u32[144,128]{1,0:T(1,128)}', space=vmem, size = 0x12000, scoped, tag = 'internal scratch']
  #allocation2 [shape = 'f32[16,32]{1,0:T(8,128)}', space=vmem, size = 0x2000, scoped, tag = 'scratch operand']
  #allocation3 [shape = 's32[1]{0}', space=sflag, size = 0x4, scoped, tag = 'scoped memory for model_wrapper_forward.1']
  #allocation4 [shape = 'u8[512]{0}', space=smem, size = 0x200, scoped, tag = 'prefetched SMEM operand 0']
  %s0 = inlined_call_operand.vmem [shape: s32[2], index: 0, kind: input, shape index: {}]
  %s1 = inlined_call_operand.vmem [shape: f32[2,16,32], index: 1, kind: input, shape index: {}]
  %s2 = inlined_call_operand.vmem [shape: f32[32,16], index: 2, kind: input, shape index: {}]
  %s3 = inlined_call_operand.hbm [shape: f32[4,32,32], index: 3, kind: input, shape index: {}]
  %s4 = inlined_call_operand.hbm [shape: f32[4,1,32], index: 4, kind: input, shape index: {}]
  %s5 = inlined_call_operand.hbm [shape: f32[4,32,128], index: 5, kind: input, shape index: {}]
  %s6 = inlined_call_operand.vmem [shape: f32[1,128], index: 6, kind: input, shape index: {}]
  %s7 = inlined_call_operand.vmem [shape: f32[32,128], index: 7, kind: input, shape index: {}]
  %s8 = inlined_call_operand.hbm [shape: f32[1,128], index: 8, kind: input, shape index: {}]
  %s9 = inlined_call_operand.hbm [shape: f32[32,128], index: 9, kind: input, shape index: {}]
  %s10 = inlined_call_operand.hbm [shape: f32[1,128], index: 10, kind: input, shape index: {}]
  %s11 = inlined_call_operand.vmem [shape: f32[2,8,128], index: 11, kind: output, shape index: {}]
  %s12 = sld [smem:[#allocation0]]
  $region74: #{model_wrapper_forward.1} parent=0
    _
  %s14 = ssub.s32 1, %s12
  %s15 = scalar_select 0, %s14, %s12
  %s16 = sshll.u32 %s0, 4
  %s17 = int_to_ptr.vmem [resolvable:$true] %s16
  %19 = dma.vmem_to_smem %s17, 16, [#allocation4], [#allocation3]
  %20 = dma.done [#allocation3], 16
  %21 = sfence
  $region1: #{model_wrapper_forward.1} parent=0
    #allocation5 [shape = 'u8[65536]{0}', space=vmem, size = 0x10000, scoped, tag = 'input window, operand 3, single buffered']
    #allocation6 [shape = 's32[1]{0}', space=sflag, size = 0x4, scoped, tag = 'scoped memory for model_wrapper_forward.1']
    #allocation7 [shape = 'u8[2048]{0}', space=vmem, size = 0x800, scoped, tag = 'input window, operand 4, single buffered']
    #allocation8 [shape = 's32[1]{0}', space=sflag, size = 0x4, scoped, tag = 'scoped memory for model_wrapper_forward.1']
    #allocation9 [shape = 'u8[65536]{0}', space=vmem, size = 0x10000, scoped, tag = 'input window, operand 5, single buffered']
    #allocation10 [shape = 'u8[512]{0}', space=vmem, size = 0x400, scoped, tag = 'input window, operand 8, single buffered']
    #allocation11 [shape = 's32[1]{0}', space=sflag, size = 0x4, scoped, tag = 'scoped memory for model_wrapper_forward.1']
    #allocation12 [shape = 'u8[16384]{0}', space=vmem, size = 0x4000, scoped, tag = 'input window, operand 9, single buffered']
    #allocation13 [shape = 'u8[512]{0}', space=vmem, size = 0x400, scoped, tag = 'input window, operand 10, single buffered']
    #allocation14 [shape = 's32[1]{0}', space=sflag, size = 0x4, scoped, tag = 'scoped memory for model_wrapper_forward.1']
    %22 = vsyncpa [#allocation6], 0
    %23 = vsyncpa [#allocation8], 0
    %24 = vsyncpa [#allocation11], 0
    %25 = vsyncpa [#allocation14], 0
    // Predicated region
    $region2: #{model_wrapper_forward.1} parent=1 // pred_check
      _
    $region3: #{model_wrapper_forward.1} parent=1 // pred_check_branch
      %27 = sbr.rel (0) target = $region5
    $region4: #{model_wrapper_forward.1} parent=1 // pred_region
      _
    $region5: #{model_wrapper_forward.1} parent=1 // pred_fallthru
      _
    // Predicated region
    $region6: #{model_wrapper_forward.1} parent=1 // pred_check
      _
    $region7: #{model_wrapper_forward.1} parent=1 // pred_check_branch
      %29 = sbr.rel (0) target = $region9
    $region8: #{model_wrapper_forward.1} parent=1 // pred_region
      _
    $region9: #{model_wrapper_forward.1} parent=1 // pred_fallthru
      _
    // Predicated region
    $region10: #{model_wrapper_forward.1} parent=1 // pred_check
      _
    $region11: #{model_wrapper_forward.1} parent=1 // pred_check_branch
      %31 = sbr.rel (0) target = $region13
    $region12: #{model_wrapper_forward.1} parent=1 // pred_region
      %s33 = ssub.s32 2048, 2048
      %34 = vsyncadd [#allocation6], %s33
      %s35 = sshll.u32 [#allocation5], 4
      %s36 = int_to_ptr.vmem [resolvable:$true] %s35
      %41 = dma.hbm_to_vmem [thread:$0]  %s3, 2048, %s36, [#allocation6], 128, 128, 8
    $region13: #{model_wrapper_forward.1} parent=1 // pred_fallthru
      _
    // Predicated region
    $region14: #{model_wrapper_forward.1} parent=1 // pred_check
      _
    $region15: #{model_wrapper_forward.1} parent=1 // pred_check_branch
      %43 = sbr.rel (0) target = $region17
    $region16: #{model_wrapper_forward.1} parent=1 // pred_region
      %s45 = ssub.s32 64, 64
      %46 = vsyncadd [#allocation8], %s45
      %s47 = sshll.u32 [#allocation7], 4
      %s48 = int_to_ptr.vmem [resolvable:$true] %s47
      %53 = dma.hbm_to_vmem [thread:$0]  %s4, 64, %s48, [#allocation8], 16, 16, 1
    $region17: #{model_wrapper_forward.1} parent=1 // pred_fallthru
      _
    // Predicated region
    $region18: #{model_wrapper_forward.1} parent=1 // pred_check
      _
    $region19: #{model_wrapper_forward.1} parent=1 // pred_check_branch
      %55 = sbr.rel (0) target = $region21
    $region20: #{model_wrapper_forward.1} parent=1 // pred_region
      %s57 = ssub.s32 2048, 2048
      %58 = vsyncadd [#allocation8], %s57
      %s59 = sshll.u32 [#allocation9], 4
      %s60 = int_to_ptr.vmem [resolvable:$true] %s59
      %65 = dma.hbm_to_vmem [thread:$0]  %s5, 2048, %s60, [#allocation8], 128, 128, 8
    $region21: #{model_wrapper_forward.1} parent=1 // pred_fallthru
      _
    // Predicated region
    $region22: #{model_wrapper_forward.1} parent=1 // pred_check
      _
    $region23: #{model_wrapper_forward.1} parent=1 // pred_check_branch
      %67 = sbr.rel (0) target = $region25
    $region24: #{model_wrapper_forward.1} parent=1 // pred_region
      _
    $region25: #{model_wrapper_forward.1} parent=1 // pred_fallthru
      _
    // Predicated region
    $region26: #{model_wrapper_forward.1} parent=1 // pred_check
      _
    $region27: #{model_wrapper_forward.1} parent=1 // pred_check_branch
      %69 = sbr.rel (0) target = $region29
    $region28: #{model_wrapper_forward.1} parent=1 // pred_region
      _
    $region29: #{model_wrapper_forward.1} parent=1 // pred_fallthru
      _
    // Predicated region
    $region30: #{model_wrapper_forward.1} parent=1 // pred_check
      _
    $region31: #{model_wrapper_forward.1} parent=1 // pred_check_branch
      %71 = sbr.rel (0) target = $region33
    $region32: #{model_wrapper_forward.1} parent=1 // pred_region
      %s73 = ssub.s32 16, 16
      %74 = vsyncadd [#allocation11], %s73
      %s76 = sshll.u32 [#allocation10], 4
      %s77 = int_to_ptr.vmem [resolvable:$true] %s76
      %79 = dma.hbm_to_vmem [thread:$0]  %s8, 16, %s77, [#allocation11]
    $region33: #{model_wrapper_forward.1} parent=1 // pred_fallthru
      _
    // Predicated region
    $region34: #{model_wrapper_forward.1} parent=1 // pred_check
      _
    $region35: #{model_wrapper_forward.1} parent=1 // pred_check_branch
      %81 = sbr.rel (0) target = $region37
    $region36: #{model_wrapper_forward.1} parent=1 // pred_region
      %s83 = ssub.s32 512, 512
      %84 = vsyncadd [#allocation11], %s83
      %s85 = sshll.u32 [#allocation12], 4
      %s86 = int_to_ptr.vmem [resolvable:$true] %s85
      %91 = dma.hbm_to_vmem [thread:$0]  %s9, 512, %s86, [#allocation11], 128, 128, 8
    $region37: #{model_wrapper_forward.1} parent=1 // pred_fallthru
      _
    // Predicated region
    $region38: #{model_wrapper_forward.1} parent=1 // pred_check
      _
    $region39: #{model_wrapper_forward.1} parent=1 // pred_check_branch
      %93 = sbr.rel (0) target = $region41
    $region40: #{model_wrapper_forward.1} parent=1 // pred_region
      %s95 = ssub.s32 16, 16
      %96 = vsyncadd [#allocation14], %s95
      %s98 = sshll.u32 [#allocation13], 4
      %s99 = int_to_ptr.vmem [resolvable:$true] %s98
      %101 = dma.hbm_to_vmem [thread:$0]  %s10, 16, %s99, [#allocation14]
    $region41: #{model_wrapper_forward.1} parent=1 // pred_fallthru
      _
    // Predicated region
    $region42: #{model_wrapper_forward.1} parent=1 // pred_check
      _
    $region43: #{model_wrapper_forward.1} parent=1 // pred_check_branch
      %103 = sbr.rel (0) target = $region45
    $region44: #{model_wrapper_forward.1} parent=1 // pred_region
      %104 = dma.done [#allocation6], 2048
    $region45: #{model_wrapper_forward.1} parent=1 // pred_fallthru
      _
    // Predicated region
    $region46: #{model_wrapper_forward.1} parent=1 // pred_check
      _
    $region47: #{model_wrapper_forward.1} parent=1 // pred_check_branch
      %106 = sbr.rel (0) target = $region49
    $region48: #{model_wrapper_forward.1} parent=1 // pred_region
      %107 = dma.done [#allocation8], 64
    $region49: #{model_wrapper_forward.1} parent=1 // pred_fallthru
      _
    // Predicated region
    $region50: #{model_wrapper_forward.1} parent=1 // pred_check
      _
    $region51: #{model_wrapper_forward.1} parent=1 // pred_check_branch
      %109 = sbr.rel (0) target = $region53
    $region52: #{model_wrapper_forward.1} parent=1 // pred_region
      %110 = dma.done [#allocation8], 2048
    $region53: #{model_wrapper_forward.1} parent=1 // pred_fallthru
      _
    // Predicated region
    $region54: #{model_wrapper_forward.1} parent=1 // pred_check
      _
    $region55: #{model_wrapper_forward.1} parent=1 // pred_check_branch
      %112 = sbr.rel (0) target = $region57
    $region56: #{model_wrapper_forward.1} parent=1 // pred_region
      %113 = dma.done [#allocation11], 16
    $region57: #{model_wrapper_forward.1} parent=1 // pred_fallthru
      _
    // Predicated region
    $region58: #{model_wrapper_forward.1} parent=1 // pred_check
      _
    $region59: #{model_wrapper_forward.1} parent=1 // pred_check_branch
      %115 = sbr.rel (0) target = $region61
    $region60: #{model_wrapper_forward.1} parent=1 // pred_region
      %116 = dma.done [#allocation11], 512
    $region61: #{model_wrapper_forward.1} parent=1 // pred_fallthru
      _
    // Predicated region
    $region62: #{model_wrapper_forward.1} parent=1 // pred_check
      _
    $region63: #{model_wrapper_forward.1} parent=1 // pred_check_branch
      %118 = sbr.rel (0) target = $region65
    $region64: #{model_wrapper_forward.1} parent=1 // pred_region
      %119 = dma.done [#allocation14], 16
    $region65: #{model_wrapper_forward.1} parent=1 // pred_fallthru
      _
    %s120 = sld [smem:[#allocation4]]
    %s121 = smul.u32 %s120, 32
    %s122 = scalar_lea.vmem [#allocation5], %s121
    %v123 = vld [vmem:[%s122] sm:$0xff]
    %v124 = vld [vmem:[%s122 + $0x8] sm:$0xff]
    %v125 = vld [vmem:[%s122 + $0x10] sm:$0xff]
    %v126 = vld [vmem:[%s122 + $0x18] sm:$0xff]
    %s127 = scalar_lea.vmem [#allocation7], %s120
    %v128 = vld [vmem:[%s127] sm:$0x1]
    %v129 = vld [vmem:[%s1] sm:$0xff]
    %v130 = vld [vmem:[%s1 + $0x8] sm:$0xff]
    %vm131 = vcmask 261120
    %v133 = vsel %vm131, %v129, 0
    %v136 = vsel %vm131, %v130, 0
    %138 = vmatprep.subr.mxu0 0.0
    %139 = vmatpush1.msra.mxu0 %v123
    %140 = vmatprep.subr.mxu0 0.0
    %141 = vmatpush1.msra.mxu0 %v124
    %142 = vmatprep.subr.mxu0 0.0
    %143 = vmatpush1.msra.mxu0 %v125
    %144 = vmatprep.subr.mxu0 0.0
    %145 = vmatpush1.msra.mxu0 %v126
    %146 = vmatprep.subr.mxu0 0.0
    %147 = vmatpush1.msra.mxu0 0.0
    %148 = vmatprep.subr.mxu0 0.0
    %149 = vmatpush1.msra.mxu0 0.0
    %150 = vmatprep.subr.mxu0 0.0
    %151 = vmatpush1.msra.mxu0 0.0
    %152 = vmatprep.subr.mxu0 0.0
    %153 = vmatpush1.msra.mxu0 0.0
    %154 = vmatprep.subr.mxu0 0.0
    %155 = vmatpush1.msra.mxu0 0.0
    %156 = vmatprep.subr.mxu0 0.0
    %157 = vmatpush1.msra.mxu0 0.0
    %158 = vmatprep.subr.mxu0 0.0
    %159 = vmatpush1.msra.mxu0 0.0
    %160 = vmatprep.subr.mxu0 0.0
    %161 = vmatpush1.msra.mxu0 0.0
    %162 = vmatprep.subr.mxu0 0.0
    %163 = vmatpush1.msra.mxu0 0.0
    %164 = vmatprep.subr.mxu0 0.0
    %165 = vmatpush1.msra.mxu0 0.0
    %166 = vmatprep.subr.mxu0 0.0
    %167 = vmatpush1.msra.mxu0 0.0
    %168 = vmatprep.subr.mxu0 0.0
    %169 = vmatpush1.msra.mxu0 0.0
    %170 = vmatprep.subr.mxu0 0.0
    %171 = vmatpush1.msra.mxu0 0.0
    %172 = vmatprep.subr.mxu0 0.0
    %173 = vmatpush1.msra.mxu0 0.0
    %174 = vmatprep.subr.mxu0 0.0
    %175 = vmatpush1.msra.mxu0 0.0
    %176 = vmatprep.subr.mxu0 0.0
    %177 = vmatpush1.msra.mxu0 0.0
    %178 = vmatprep.subr.mxu0 0.0
    %179 = vmatpush1.msra.mxu0 0.0
    %180 = vmatprep.subr.mxu0 0.0
    %181 = vmatpush1.msra.mxu0 0.0
    %182 = vmatprep.subr.mxu0 0.0
    %183 = vmatpush1.msra.mxu0 0.0
    %184 = vmatprep.subr.mxu0 0.0
    %185 = vmatpush1.msra.mxu0 0.0
    %186 = vmatprep.subr.mxu0 0.0
    %187 = vmatpush1.msra.mxu0 0.0
    %188 = vmatprep.subr.mxu0 0.0
    %189 = vmatpush1.msra.mxu0 0.0
    %190 = vmatprep.subr.mxu0 0.0
    %191 = vmatpush1.msra.mxu0 0.0
    %192 = vmatprep.subr.mxu0 0.0
    %193 = vmatpush1.msra.mxu0 0.0
    %194 = vmatprep.subr.mxu0 0.0
    %195 = vmatpush1.msra.mxu0 0.0
    %196 = vmatprep.subr.mxu0 0.0
    %197 = vmatpush1.msra.mxu0 0.0
    %198 = vmatprep.subr.mxu0 0.0
    %199 = vmatpush1.msra.mxu0 0.0
    %200 = vmatprep.subr.mxu0 0.0
    %201 = vmatpush1.msra.mxu0 0.0
    %202 = vmatprep.mubr.f32.mxu0 0.0
    %203 = vmatmul.mubr.f32.gmra.mrb[0].mxu0 %v133
    %v204 = vpop.f32.mrb[0].mxu0
    %v205 = vadd.f32 0.0, %v204
    %v206 = vpop.f32.mrb[0].mxu0
    %207 = vmatprep.mubr.f32.mxu0 0.0
    %208 = vmatmul.mubr.f32.gmra.mrb[0].mxu0 %v136
    %v209 = vpop.f32.mrb[0].mxu0
    %v210 = vadd.f32 0.0, %v209
    %v211 = vpop.f32.mrb[0].mxu0
    %212 = vdwg.mxu0
    %v213 = vld [vmem:[%s2] sm:$0xff]
    %v214 = vld [vmem:[%s2 + $0x8] sm:$0xff]
    %v215 = vld [vmem:[%s2 + $0x10] sm:$0xff]
    %v216 = vld [vmem:[%s2 + $0x18] sm:$0xff]
    %v218 = vlaneseq
    %v219 = vshrl.u32 %v218, 7
    %v220 = vsub.s32 0, %v219
    %v221 = vrot.slane %v128, %v220
    %vm223 = vcmask 130048
    %v225 = vsel %vm223, %v213, 0
    %v228 = vsel %vm223, %v214, 0
    %v231 = vsel %vm223, %v215, 0
    %v234 = vsel %vm223, %v216, 0
    %236 = vmatprep.subr.mxu0 0.0
    %237 = vmatpush1.msra.mxu0 %v205
    %238 = vmatprep.subr.mxu0 0.0
    %239 = vmatpush1.msra.mxu0 %v210
    %240 = vmatprep.subr.mxu0 0.0
    %241 = vmatpush1.msra.mxu0 0.0
    %242 = vmatprep.subr.mxu0 0.0
    %243 = vmatpush1.msra.mxu0 0.0
    %244 = vmatprep.subr.mxu0 0.0
    %245 = vmatpush1.msra.mxu0 0.0
    %246 = vmatprep.subr.mxu0 0.0
    %247 = vmatpush1.msra.mxu0 0.0
    %248 = vmatprep.subr.mxu0 0.0
    %249 = vmatpush1.msra.mxu0 0.0
    %250 = vmatprep.subr.mxu0 0.0
    %251 = vmatpush1.msra.mxu0 0.0
    %252 = vmatprep.subr.mxu0 0.0
    %253 = vmatpush1.msra.mxu0 0.0
    %254 = vmatprep.subr.mxu0 0.0
    %255 = vmatpush1.msra.mxu0 0.0
    %256 = vmatprep.subr.mxu0 0.0
    %257 = vmatpush1.msra.mxu0 0.0
    %258 = vmatprep.subr.mxu0 0.0
    %259 = vmatpush1.msra.mxu0 0.0
    %260 = vmatprep.subr.mxu0 0.0
    %261 = vmatpush1.msra.mxu0 0.0
    %262 = vmatprep.subr.mxu0 0.0
    %263 = vmatpush1.msra.mxu0 0.0
    %264 = vmatprep.subr.mxu0 0.0
    %265 = vmatpush1.msra.mxu0 0.0
    %266 = vmatprep.subr.mxu0 0.0
    %267 = vmatpush1.msra.mxu0 0.0
    %268 = vmatprep.subr.mxu0 0.0
    %269 = vmatpush1.msra.mxu0 0.0
    %270 = vmatprep.subr.mxu0 0.0
    %271 = vmatpush1.msra.mxu0 0.0
    %272 = vmatprep.subr.mxu0 0.0
    %273 = vmatpush1.msra.mxu0 0.0
    %274 = vmatprep.subr.mxu0 0.0
    %275 = vmatpush1.msra.mxu0 0.0
    %276 = vmatprep.subr.mxu0 0.0
    %277 = vmatpush1.msra.mxu0 0.0
    %278 = vmatprep.subr.mxu0 0.0
    %279 = vmatpush1.msra.mxu0 0.0
    %280 = vmatprep.subr.mxu0 0.0
    %281 = vmatpush1.msra.mxu0 0.0
    %282 = vmatprep.subr.mxu0 0.0
    %283 = vmatpush1.msra.mxu0 0.0
    %284 = vmatprep.subr.mxu0 0.0
    %285 = vmatpush1.msra.mxu0 0.0
    %286 = vmatprep.subr.mxu0 0.0
    %287 = vmatpush1.msra.mxu0 0.0
    %288 = vmatprep.subr.mxu0 0.0
    %289 = vmatpush1.msra.mxu0 0.0
    %290 = vmatprep.subr.mxu0 0.0
    %291 = vmatpush1.msra.mxu0 0.0
    %292 = vmatprep.subr.mxu0 0.0
    %293 = vmatpush1.msra.mxu0 0.0
    %294 = vmatprep.subr.mxu0 0.0
    %295 = vmatpush1.msra.mxu0 0.0
    %296 = vmatprep.subr.mxu0 0.0
    %297 = vmatpush1.msra.mxu0 0.0
    %298 = vmatprep.subr.mxu0 0.0
    %299 = vmatpush1.msra.mxu0 0.0
    %300 = vmatprep.mubr.f32.mxu0 0.0
    %301 = vmatmul.mubr.f32.gmra.mrb[0].mxu0 %v225
    %v302 = vpop.f32.mrb[0].mxu0
    %v303 = vadd.f32 %v221, %v302
    %v304 = vpop.f32.mrb[0].mxu0
    %305 = vmatprep.mubr.f32.mxu0 0.0
    %306 = vmatmul.mubr.f32.gmra.mrb[0].mxu0 %v228
    %v307 = vpop.f32.mrb[0].mxu0
    %v308 = vadd.f32 %v221, %v307
    %v309 = vpop.f32.mrb[0].mxu0
    %310 = vmatprep.mubr.f32.mxu0 0.0
    %311 = vmatmul.mubr.f32.gmra.mrb[0].mxu0 %v231
    %v312 = vpop.f32.mrb[0].mxu0
    %v313 = vadd.f32 %v221, %v312
    %v314 = vpop.f32.mrb[0].mxu0
    %315 = vmatprep.mubr.f32.mxu0 0.0
    %316 = vmatmul.mubr.f32.gmra.mrb[0].mxu0 %v234
    %v317 = vpop.f32.mrb[0].mxu0
    %v318 = vadd.f32 %v221, %v317
    %v319 = vpop.f32.mrb[0].mxu0
    %320 = vdwg.mxu0
    %v321 = vand.u32 2147483647, %v303
    %v322 = vand.u32 2147483647, %v308
    %v323 = vand.u32 2147483647, %v313
    %v324 = vand.u32 2147483647, %v318
    %v325 = vadd.f32 %v321, 1.0
    %v326 = vadd.f32 %v322, 1.0
    %v327 = vadd.f32 %v323, 1.0
    %v328 = vadd.f32 %v324, 1.0
    %v329 = vrcp.pop %v325
    %v330 = vrcp.pop %v326
    %v331 = vrcp.pop %v327
    %v332 = vrcp.pop %v328
    %v333 = vmul.f32 %v303, %v329
    %v334 = vmul.f32 %v308, %v330
    %v335 = vmul.f32 %v313, %v331
    %v336 = vmul.f32 %v318, %v332
    %s337 = sld [smem:[#allocation4 + $0x1]]
    %s338 = smul.u32 %s337, 32
    %s339 = scalar_lea.vmem [#allocation5], %s338
    %v340 = vld [vmem:[%s339] sm:$0xff]
    %v341 = vld [vmem:[%s339 + $0x8] sm:$0xff]
    %v342 = vld [vmem:[%s339 + $0x10] sm:$0xff]
    %v343 = vld [vmem:[%s339 + $0x18] sm:$0xff]
    %s344 = scalar_lea.vmem [#allocation7], %s337
    %v345 = vld [vmem:[%s344] sm:$0x1]
    %s346 = scalar_lea.vmem %s1, 16
    %v347 = vld [vmem:[%s346] sm:$0xff]
    %v348 = vld [vmem:[%s346 + $0x8] sm:$0xff]
    %v350 = vsel %vm131, %v347, 0
    %v353 = vsel %vm131, %v348, 0
    %355 = vmatprep.subr.mxu0 0.0
    %356 = vmatpush1.msra.mxu0 %v340
    %357 = vmatprep.subr.mxu0 0.0
    %358 = vmatpush1.msra.mxu0 %v341
    %359 = vmatprep.subr.mxu0 0.0
    %360 = vmatpush1.msra.mxu0 %v342
    %361 = vmatprep.subr.mxu0 0.0
    %362 = vmatpush1.msra.mxu0 %v343
    %363 = vmatprep.subr.mxu0 0.0
    %364 = vmatpush1.msra.mxu0 0.0
    %365 = vmatprep.subr.mxu0 0.0
    %366 = vmatpush1.msra.mxu0 0.0
    %367 = vmatprep.subr.mxu0 0.0
    %368 = vmatpush1.msra.mxu0 0.0
    %369 = vmatprep.subr.mxu0 0.0
    %370 = vmatpush1.msra.mxu0 0.0
    %371 = vmatprep.subr.mxu0 0.0
    %372 = vmatpush1.msra.mxu0 0.0
    %373 = vmatprep.subr.mxu0 0.0
    %374 = vmatpush1.msra.mxu0 0.0
    %375 = vmatprep.subr.mxu0 0.0
    %376 = vmatpush1.msra.mxu0 0.0
    %377 = vmatprep.subr.mxu0 0.0
    %378 = vmatpush1.msra.mxu0 0.0
    %379 = vmatprep.subr.mxu0 0.0
    %380 = vmatpush1.msra.mxu0 0.0
    %381 = vmatprep.subr.mxu0 0.0
    %382 = vmatpush1.msra.mxu0 0.0
    %383 = vmatprep.subr.mxu0 0.0
    %384 = vmatpush1.msra.mxu0 0.0
    %385 = vmatprep.subr.mxu0 0.0
    %386 = vmatpush1.msra.mxu0 0.0
    %387 = vmatprep.subr.mxu0 0.0
    %388 = vmatpush1.msra.mxu0 0.0
    %389 = vmatprep.subr.mxu0 0.0
    %390 = vmatpush1.msra.mxu0 0.0
    %391 = vmatprep.subr.mxu0 0.0
    %392 = vmatpush1.msra.mxu0 0.0
    %393 = vmatprep.subr.mxu0 0.0
    %394 = vmatpush1.msra.mxu0 0.0
    %395 = vmatprep.subr.mxu0 0.0
    %396 = vmatpush1.msra.mxu0 0.0
    %397 = vmatprep.subr.mxu0 0.0
    %398 = vmatpush1.msra.mxu0 0.0
    %399 = vmatprep.subr.mxu0 0.0
    %400 = vmatpush1.msra.mxu0 0.0
    %401 = vmatprep.subr.mxu0 0.0
    %402 = vmatpush1.msra.mxu0 0.0
    %403 = vmatprep.subr.mxu0 0.0
    %404 = vmatpush1.msra.mxu0 0.0
    %405 = vmatprep.subr.mxu0 0.0
    %406 = vmatpush1.msra.mxu0 0.0
    %407 = vmatprep.subr.mxu0 0.0
    %408 = vmatpush1.msra.mxu0 0.0
    %409 = vmatprep.subr.mxu0 0.0
    %410 = vmatpush1.msra.mxu0 0.0
    %411 = vmatprep.subr.mxu0 0.0
    %412 = vmatpush1.msra.mxu0 0.0
    %413 = vmatprep.subr.mxu0 0.0
    %414 = vmatpush1.msra.mxu0 0.0
    %415 = vmatprep.subr.mxu0 0.0
    %416 = vmatpush1.msra.mxu0 0.0
    %417 = vmatprep.subr.mxu0 0.0
    %418 = vmatpush1.msra.mxu0 0.0
    %419 = vmatprep.mubr.f32.mxu0 0.0
    %420 = vmatmul.mubr.f32.gmra.mrb[0].mxu0 %v350
    %v421 = vpop.f32.mrb[0].mxu0
    %v422 = vadd.f32 0.0, %v421
    %v423 = vpop.f32.mrb[0].mxu0
    %424 = vmatprep.mubr.f32.mxu0 0.0
    %425 = vmatmul.mubr.f32.gmra.mrb[0].mxu0 %v353
    %v426 = vpop.f32.mrb[0].mxu0
    %v427 = vadd.f32 0.0, %v426
    %v428 = vpop.f32.mrb[0].mxu0
    %429 = vdwg.mxu0
    %v431 = vlaneseq
    %v432 = vshrl.u32 %v431, 7
    %v433 = vsub.s32 0, %v432
    %v434 = vrot.slane %v345, %v433
    %436 = vmatprep.subr.mxu0 0.0
    %437 = vmatpush1.msra.mxu0 %v422
    %438 = vmatprep.subr.mxu0 0.0
    %439 = vmatpush1.msra.mxu0 %v427
    %440 = vmatprep.subr.mxu0 0.0
    %441 = vmatpush1.msra.mxu0 0.0
    %442 = vmatprep.subr.mxu0 0.0
    %443 = vmatpush1.msra.mxu0 0.0
    %444 = vmatprep.subr.mxu0 0.0
    %445 = vmatpush1.msra.mxu0 0.0
    %446 = vmatprep.subr.mxu0 0.0
    %447 = vmatpush1.msra.mxu0 0.0
    %448 = vmatprep.subr.mxu0 0.0
    %449 = vmatpush1.msra.mxu0 0.0
    %450 = vmatprep.subr.mxu0 0.0
    %451 = vmatpush1.msra.mxu0 0.0
    %452 = vmatprep.subr.mxu0 0.0
    %453 = vmatpush1.msra.mxu0 0.0
    %454 = vmatprep.subr.mxu0 0.0
    %455 = vmatpush1.msra.mxu0 0.0
    %456 = vmatprep.subr.mxu0 0.0
    %457 = vmatpush1.msra.mxu0 0.0
    %458 = vmatprep.subr.mxu0 0.0
    %459 = vmatpush1.msra.mxu0 0.0
    %460 = vmatprep.subr.mxu0 0.0
    %461 = vmatpush1.msra.mxu0 0.0
    %462 = vmatprep.subr.mxu0 0.0
    %463 = vmatpush1.msra.mxu0 0.0
    %464 = vmatprep.subr.mxu0 0.0
    %465 = vmatpush1.msra.mxu0 0.0
    %466 = vmatprep.subr.mxu0 0.0
    %467 = vmatpush1.msra.mxu0 0.0
    %468 = vmatprep.subr.mxu0 0.0
    %469 = vmatpush1.msra.mxu0 0.0
    %470 = vmatprep.subr.mxu0 0.0
    %471 = vmatpush1.msra.mxu0 0.0
    %472 = vmatprep.subr.mxu0 0.0
    %473 = vmatpush1.msra.mxu0 0.0
    %474 = vmatprep.subr.mxu0 0.0
    %475 = vmatpush1.msra.mxu0 0.0
    %476 = vmatprep.subr.mxu0 0.0
    %477 = vmatpush1.msra.mxu0 0.0
    %478 = vmatprep.subr.mxu0 0.0
    %479 = vmatpush1.msra.mxu0 0.0
    %480 = vmatprep.subr.mxu0 0.0
    %481 = vmatpush1.msra.mxu0 0.0
    %482 = vmatprep.subr.mxu0 0.0
    %483 = vmatpush1.msra.mxu0 0.0
    %484 = vmatprep.subr.mxu0 0.0
    %485 = vmatpush1.msra.mxu0 0.0
    %486 = vmatprep.subr.mxu0 0.0
    %487 = vmatpush1.msra.mxu0 0.0
    %488 = vmatprep.subr.mxu0 0.0
    %489 = vmatpush1.msra.mxu0 0.0
    %490 = vmatprep.subr.mxu0 0.0
    %491 = vmatpush1.msra.mxu0 0.0
    %492 = vmatprep.subr.mxu0 0.0
    %493 = vmatpush1.msra.mxu0 0.0
    %494 = vmatprep.subr.mxu0 0.0
    %495 = vmatpush1.msra.mxu0 0.0
    %496 = vmatprep.subr.mxu0 0.0
    %497 = vmatpush1.msra.mxu0 0.0
    %498 = vmatprep.subr.mxu0 0.0
    %499 = vmatpush1.msra.mxu0 0.0
    %500 = vmatprep.mubr.f32.mxu0 0.0
    %501 = vmatmul.mubr.f32.gmra.mrb[0].mxu0 %v225
    %v502 = vpop.f32.mrb[0].mxu0
    %v503 = vadd.f32 %v434, %v502
    %v504 = vpop.f32.mrb[0].mxu0
    %505 = vmatprep.mubr.f32.mxu0 0.0
    %506 = vmatmul.mubr.f32.gmra.mrb[0].mxu0 %v228
    %v507 = vpop.f32.mrb[0].mxu0
    %v508 = vadd.f32 %v434, %v507
    %v509 = vpop.f32.mrb[0].mxu0
    %510 = vmatprep.mubr.f32.mxu0 0.0
    %511 = vmatmul.mubr.f32.gmra.mrb[0].mxu0 %v231
    %v512 = vpop.f32.mrb[0].mxu0
    %v513 = vadd.f32 %v434, %v512
    %v514 = vpop.f32.mrb[0].mxu0
    %515 = vmatprep.mubr.f32.mxu0 0.0
    %516 = vmatmul.mubr.f32.gmra.mrb[0].mxu0 %v234
    %v517 = vpop.f32.mrb[0].mxu0
    %v518 = vadd.f32 %v434, %v517
    %v519 = vpop.f32.mrb[0].mxu0
    %520 = vdwg.mxu0
    %v521 = vand.u32 2147483647, %v503
    %v522 = vand.u32 2147483647, %v508
    %v523 = vand.u32 2147483647, %v513
    %v524 = vand.u32 2147483647, %v518
    %v525 = vadd.f32 %v521, 1.0
    %v526 = vadd.f32 %v522, 1.0
    %v527 = vadd.f32 %v523, 1.0
    %v528 = vadd.f32 %v524, 1.0
    %v529 = vrcp.pop %v525
    %v530 = vrcp.pop %v526
    %v531 = vrcp.pop %v527
    %v532 = vrcp.pop %v528
    %v533 = vmul.f32 %v503, %v529
    %v534 = vmul.f32 %v508, %v530
    %v535 = vmul.f32 %v513, %v531
    %v536 = vmul.f32 %v518, %v532
    %v537 = vld [vmem:[%s6] sm:$0x1]
    %v538 = vld [vmem:[#allocation9] sm:$0xff]
    %v539 = vld [vmem:[#allocation9 + $0x8] sm:$0xff]
    %v540 = vld [vmem:[#allocation9 + $0x10] sm:$0xff]
    %v541 = vld [vmem:[#allocation9 + $0x18] sm:$0xff]
    %v543 = vsel %vm131, %v333, 0
    %v546 = vsel %vm131, %v533, 0
    %548 = vmatprep.subr.mxu0 0.0
    %549 = vmatpush1.msra.mxu0 %v538
    %550 = vmatprep.subr.mxu0 0.0
    %551 = vmatpush1.msra.mxu0 %v539
    %552 = vmatprep.subr.mxu0 0.0
    %553 = vmatpush1.msra.mxu0 %v540
    %554 = vmatprep.subr.mxu0 0.0
    %555 = vmatpush1.msra.mxu0 %v541
    %556 = vmatprep.subr.mxu0 0.0
    %557 = vmatpush1.msra.mxu0 0.0
    %558 = vmatprep.subr.mxu0 0.0
    %559 = vmatpush1.msra.mxu0 0.0
    %560 = vmatprep.subr.mxu0 0.0
    %561 = vmatpush1.msra.mxu0 0.0
    %562 = vmatprep.subr.mxu0 0.0
    %563 = vmatpush1.msra.mxu0 0.0
    %564 = vmatprep.subr.mxu0 0.0
    %565 = vmatpush1.msra.mxu0 0.0
    %566 = vmatprep.subr.mxu0 0.0
    %567 = vmatpush1.msra.mxu0 0.0
    %568 = vmatprep.subr.mxu0 0.0
    %569 = vmatpush1.msra.mxu0 0.0
    %570 = vmatprep.subr.mxu0 0.0
    %571 = vmatpush1.msra.mxu0 0.0
    %572 = vmatprep.subr.mxu0 0.0
    %573 = vmatpush1.msra.mxu0 0.0
    %574 = vmatprep.subr.mxu0 0.0
    %575 = vmatpush1.msra.mxu0 0.0
    %576 = vmatprep.subr.mxu0 0.0
    %577 = vmatpush1.msra.mxu0 0.0
    %578 = vmatprep.subr.mxu0 0.0
    %579 = vmatpush1.msra.mxu0 0.0
    %580 = vmatprep.subr.mxu0 0.0
    %581 = vmatpush1.msra.mxu0 0.0
    %582 = vmatprep.subr.mxu0 0.0
    %583 = vmatpush1.msra.mxu0 0.0
    %584 = vmatprep.subr.mxu0 0.0
    %585 = vmatpush1.msra.mxu0 0.0
    %586 = vmatprep.subr.mxu0 0.0
    %587 = vmatpush1.msra.mxu0 0.0
    %588 = vmatprep.subr.mxu0 0.0
    %589 = vmatpush1.msra.mxu0 0.0
    %590 = vmatprep.subr.mxu0 0.0
    %591 = vmatpush1.msra.mxu0 0.0
    %592 = vmatprep.subr.mxu0 0.0
    %593 = vmatpush1.msra.mxu0 0.0
    %594 = vmatprep.subr.mxu0 0.0
    %595 = vmatpush1.msra.mxu0 0.0
    %596 = vmatprep.subr.mxu0 0.0
    %597 = vmatpush1.msra.mxu0 0.0
    %598 = vmatprep.subr.mxu0 0.0
    %599 = vmatpush1.msra.mxu0 0.0
    %600 = vmatprep.subr.mxu0 0.0
    %601 = vmatpush1.msra.mxu0 0.0
    %602 = vmatprep.subr.mxu0 0.0
    %603 = vmatpush1.msra.mxu0 0.0
    %604 = vmatprep.subr.mxu0 0.0
    %605 = vmatpush1.msra.mxu0 0.0
    %606 = vmatprep.subr.mxu0 0.0
    %607 = vmatpush1.msra.mxu0 0.0
    %608 = vmatprep.subr.mxu0 0.0
    %609 = vmatpush1.msra.mxu0 0.0
    %610 = vmatprep.subr.mxu0 0.0
    %611 = vmatpush1.msra.mxu0 0.0
    %612 = vmatprep.mubr.f32.mxu0 0.0
    %613 = vmatmul.mubr.f32.gmra.mrb[0].mxu0 %v543
    %v614 = vpop.f32.mrb[0].mxu0
    %v615 = vadd.f32 0.0, %v614
    %v616 = vpop.f32.mrb[0].mxu0
    %617 = vmatprep.mubr.f32.mxu0 0.0
    %618 = vmatmul.mubr.f32.gmra.mrb[0].mxu0 %v546
    %v619 = vpop.f32.mrb[0].mxu0
    %v620 = vadd.f32 0.0, %v619
    %v621 = vpop.f32.mrb[0].mxu0
    %622 = vdwg.mxu0
    %v624 = vlaneseq
    %v625 = vshrl.u32 %v624, 7
    %v626 = vsub.s32 0, %v625
    %v627 = vrot.slane %v537, %v626
    %v629 = vadd.f32 %v627, %v615
    %v630 = vadd.f32 %v627, %v620
    %s631 = scalar_lea.vmem [#allocation9], 32
    %v632 = vld [vmem:[%s631] sm:$0xff]
    %v633 = vld [vmem:[%s631 + $0x8] sm:$0xff]
    %v634 = vld [vmem:[%s631 + $0x10] sm:$0xff]
    %v635 = vld [vmem:[%s631 + $0x18] sm:$0xff]
    %v637 = vsel %vm131, %v334, 0
    %v640 = vsel %vm131, %v534, 0
    %642 = vmatprep.subr.mxu0 0.0
    %643 = vmatpush1.msra.mxu0 %v632
    %644 = vmatprep.subr.mxu0 0.0
    %645 = vmatpush1.msra.mxu0 %v633
    %646 = vmatprep.subr.mxu0 0.0
    %647 = vmatpush1.msra.mxu0 %v634
    %648 = vmatprep.subr.mxu0 0.0
    %649 = vmatpush1.msra.mxu0 %v635
    %650 = vmatprep.subr.mxu0 0.0
    %651 = vmatpush1.msra.mxu0 0.0
    %652 = vmatprep.subr.mxu0 0.0
    %653 = vmatpush1.msra.mxu0 0.0
    %654 = vmatprep.subr.mxu0 0.0
    %655 = vmatpush1.msra.mxu0 0.0
    %656 = vmatprep.subr.mxu0 0.0
    %657 = vmatpush1.msra.mxu0 0.0
    %658 = vmatprep.subr.mxu0 0.0
    %659 = vmatpush1.msra.mxu0 0.0
    %660 = vmatprep.subr.mxu0 0.0
    %661 = vmatpush1.msra.mxu0 0.0
    %662 = vmatprep.subr.mxu0 0.0
    %663 = vmatpush1.msra.mxu0 0.0
    %664 = vmatprep.subr.mxu0 0.0
    %665 = vmatpush1.msra.mxu0 0.0
    %666 = vmatprep.subr.mxu0 0.0
    %667 = vmatpush1.msra.mxu0 0.0
    %668 = vmatprep.subr.mxu0 0.0
    %669 = vmatpush1.msra.mxu0 0.0
    %670 = vmatprep.subr.mxu0 0.0
    %671 = vmatpush1.msra.mxu0 0.0
    %672 = vmatprep.subr.mxu0 0.0
    %673 = vmatpush1.msra.mxu0 0.0
    %674 = vmatprep.subr.mxu0 0.0
    %675 = vmatpush1.msra.mxu0 0.0
    %676 = vmatprep.subr.mxu0 0.0
    %677 = vmatpush1.msra.mxu0 0.0
    %678 = vmatprep.subr.mxu0 0.0
    %679 = vmatpush1.msra.mxu0 0.0
    %680 = vmatprep.subr.mxu0 0.0
    %681 = vmatpush1.msra.mxu0 0.0
    %682 = vmatprep.subr.mxu0 0.0
    %683 = vmatpush1.msra.mxu0 0.0
    %684 = vmatprep.subr.mxu0 0.0
    %685 = vmatpush1.msra.mxu0 0.0
    %686 = vmatprep.subr.mxu0 0.0
    %687 = vmatpush1.msra.mxu0 0.0
    %688 = vmatprep.subr.mxu0 0.0
    %689 = vmatpush1.msra.mxu0 0.0
    %690 = vmatprep.subr.mxu0 0.0
    %691 = vmatpush1.msra.mxu0 0.0
    %692 = vmatprep.subr.mxu0 0.0
    %693 = vmatpush1.msra.mxu0 0.0
    %694 = vmatprep.subr.mxu0 0.0
    %695 = vmatpush1.msra.mxu0 0.0
    %696 = vmatprep.subr.mxu0 0.0
    %697 = vmatpush1.msra.mxu0 0.0
    %698 = vmatprep.subr.mxu0 0.0
    %699 = vmatpush1.msra.mxu0 0.0
    %700 = vmatprep.subr.mxu0 0.0
    %701 = vmatpush1.msra.mxu0 0.0
    %702 = vmatprep.subr.mxu0 0.0
    %703 = vmatpush1.msra.mxu0 0.0
    %704 = vmatprep.subr.mxu0 0.0
    %705 = vmatpush1.msra.mxu0 0.0
    %706 = vmatprep.mubr.f32.mxu0 0.0
    %707 = vmatmul.mubr.f32.gmra.mrb[0].mxu0 %v637
    %v708 = vpop.f32.mrb[0].mxu0
    %v709 = vadd.f32 0.0, %v708
    %v710 = vpop.f32.mrb[0].mxu0
    %711 = vmatprep.mubr.f32.mxu0 0.0
    %712 = vmatmul.mubr.f32.gmra.mrb[0].mxu0 %v640
    %v713 = vpop.f32.mrb[0].mxu0
    %v714 = vadd.f32 0.0, %v713
    %v715 = vpop.f32.mrb[0].mxu0
    %716 = vdwg.mxu0
    %v717 = vadd.f32 %v629, %v709
    %v718 = vadd.f32 %v630, %v714
    %s719 = scalar_lea.vmem [#allocation9], 64
    %v720 = vld [vmem:[%s719] sm:$0xff]
    %v721 = vld [vmem:[%s719 + $0x8] sm:$0xff]
    %v722 = vld [vmem:[%s719 + $0x10] sm:$0xff]
    %v723 = vld [vmem:[%s719 + $0x18] sm:$0xff]
    %v725 = vsel %vm131, %v335, 0
    %v728 = vsel %vm131, %v535, 0
    %730 = vmatprep.subr.mxu0 0.0
    %731 = vmatpush1.msra.mxu0 %v720
    %732 = vmatprep.subr.mxu0 0.0
    %733 = vmatpush1.msra.mxu0 %v721
    %734 = vmatprep.subr.mxu0 0.0
    %735 = vmatpush1.msra.mxu0 %v722
    %736 = vmatprep.subr.mxu0 0.0
    %737 = vmatpush1.msra.mxu0 %v723
    %738 = vmatprep.subr.mxu0 0.0
    %739 = vmatpush1.msra.mxu0 0.0
    %740 = vmatprep.subr.mxu0 0.0
    %741 = vmatpush1.msra.mxu0 0.0
    %742 = vmatprep.subr.mxu0 0.0
    %743 = vmatpush1.msra.mxu0 0.0
    %744 = vmatprep.subr.mxu0 0.0
    %745 = vmatpush1.msra.mxu0 0.0
    %746 = vmatprep.subr.mxu0 0.0
    %747 = vmatpush1.msra.mxu0 0.0
    %748 = vmatprep.subr.mxu0 0.0
    %749 = vmatpush1.msra.mxu0 0.0
    %750 = vmatprep.subr.mxu0 0.0
    %751 = vmatpush1.msra.mxu0 0.0
    %752 = vmatprep.subr.mxu0 0.0
    %753 = vmatpush1.msra.mxu0 0.0
    %754 = vmatprep.subr.mxu0 0.0
    %755 = vmatpush1.msra.mxu0 0.0
    %756 = vmatprep.subr.mxu0 0.0
    %757 = vmatpush1.msra.mxu0 0.0
    %758 = vmatprep.subr.mxu0 0.0
    %759 = vmatpush1.msra.mxu0 0.0
    %760 = vmatprep.subr.mxu0 0.0
    %761 = vmatpush1.msra.mxu0 0.0
    %762 = vmatprep.subr.mxu0 0.0
    %763 = vmatpush1.msra.mxu0 0.0
    %764 = vmatprep.subr.mxu0 0.0
    %765 = vmatpush1.msra.mxu0 0.0
    %766 = vmatprep.subr.mxu0 0.0
    %767 = vmatpush1.msra.mxu0 0.0
    %768 = vmatprep.subr.mxu0 0.0
    %769 = vmatpush1.msra.mxu0 0.0
    %770 = vmatprep.subr.mxu0 0.0
    %771 = vmatpush1.msra.mxu0 0.0
    %772 = vmatprep.subr.mxu0 0.0
    %773 = vmatpush1.msra.mxu0 0.0
    %774 = vmatprep.subr.mxu0 0.0
    %775 = vmatpush1.msra.mxu0 0.0
    %776 = vmatprep.subr.mxu0 0.0
    %777 = vmatpush1.msra.mxu0 0.0
    %778 = vmatprep.subr.mxu0 0.0
    %779 = vmatpush1.msra.mxu0 0.0
    %780 = vmatprep.subr.mxu0 0.0
    %781 = vmatpush1.msra.mxu0 0.0
    %782 = vmatprep.subr.mxu0 0.0
    %783 = vmatpush1.msra.mxu0 0.0
    %784 = vmatprep.subr.mxu0 0.0
    %785 = vmatpush1.msra.mxu0 0.0
    %786 = vmatprep.subr.mxu0 0.0
    %787 = vmatpush1.msra.mxu0 0.0
    %788 = vmatprep.subr.mxu0 0.0
    %789 = vmatpush1.msra.mxu0 0.0
    %790 = vmatprep.subr.mxu0 0.0
    %791 = vmatpush1.msra.mxu0 0.0
    %792 = vmatprep.subr.mxu0 0.0
    %793 = vmatpush1.msra.mxu0 0.0
    %794 = vmatprep.mubr.f32.mxu0 0.0
    %795 = vmatmul.mubr.f32.gmra.mrb[0].mxu0 %v725
    %v796 = vpop.f32.mrb[0].mxu0
    %v797 = vadd.f32 0.0, %v796
    %v798 = vpop.f32.mrb[0].mxu0
    %799 = vmatprep.mubr.f32.mxu0 0.0
    %800 = vmatmul.mubr.f32.gmra.mrb[0].mxu0 %v728
    %v801 = vpop.f32.mrb[0].mxu0
    %v802 = vadd.f32 0.0, %v801
    %v803 = vpop.f32.mrb[0].mxu0
    %804 = vdwg.mxu0
    %v805 = vadd.f32 %v717, %v797
    %v806 = vadd.f32 %v718, %v802
    %s807 = scalar_lea.vmem [#allocation9], 96
    %v808 = vld [vmem:[%s807] sm:$0xff]
    %v809 = vld [vmem:[%s807 + $0x8] sm:$0xff]
    %v810 = vld [vmem:[%s807 + $0x10] sm:$0xff]
    %v811 = vld [vmem:[%s807 + $0x18] sm:$0xff]
    %v813 = vsel %vm131, %v336, 0
    %v816 = vsel %vm131, %v536, 0
    %818 = vmatprep.subr.mxu0 0.0
    %819 = vmatpush1.msra.mxu0 %v808
    %820 = vmatprep.subr.mxu0 0.0
    %821 = vmatpush1.msra.mxu0 %v809
    %822 = vmatprep.subr.mxu0 0.0
    %823 = vmatpush1.msra.mxu0 %v810
    %824 = vmatprep.subr.mxu0 0.0
    %825 = vmatpush1.msra.mxu0 %v811
    %826 = vmatprep.subr.mxu0 0.0
    %827 = vmatpush1.msra.mxu0 0.0
    %828 = vmatprep.subr.mxu0 0.0
    %829 = vmatpush1.msra.mxu0 0.0
    %830 = vmatprep.subr.mxu0 0.0
    %831 = vmatpush1.msra.mxu0 0.0
    %832 = vmatprep.subr.mxu0 0.0
    %833 = vmatpush1.msra.mxu0 0.0
    %834 = vmatprep.subr.mxu0 0.0
    %835 = vmatpush1.msra.mxu0 0.0
    %836 = vmatprep.subr.mxu0 0.0
    %837 = vmatpush1.msra.mxu0 0.0
    %838 = vmatprep.subr.mxu0 0.0
    %839 = vmatpush1.msra.mxu0 0.0
    %840 = vmatprep.subr.mxu0 0.0
    %841 = vmatpush1.msra.mxu0 0.0
    %842 = vmatprep.subr.mxu0 0.0
    %843 = vmatpush1.msra.mxu0 0.0
    %844 = vmatprep.subr.mxu0 0.0
    %845 = vmatpush1.msra.mxu0 0.0
    %846 = vmatprep.subr.mxu0 0.0
    %847 = vmatpush1.msra.mxu0 0.0
    %848 = vmatprep.subr.mxu0 0.0
    %849 = vmatpush1.msra.mxu0 0.0
    %850 = vmatprep.subr.mxu0 0.0
    %851 = vmatpush1.msra.mxu0 0.0
    %852 = vmatprep.subr.mxu0 0.0
    %853 = vmatpush1.msra.mxu0 0.0
    %854 = vmatprep.subr.mxu0 0.0
    %855 = vmatpush1.msra.mxu0 0.0
    %856 = vmatprep.subr.mxu0 0.0
    %857 = vmatpush1.msra.mxu0 0.0
    %858 = vmatprep.subr.mxu0 0.0
    %859 = vmatpush1.msra.mxu0 0.0
    %860 = vmatprep.subr.mxu0 0.0
    %861 = vmatpush1.msra.mxu0 0.0
    %862 = vmatprep.subr.mxu0 0.0
    %863 = vmatpush1.msra.mxu0 0.0
    %864 = vmatprep.subr.mxu0 0.0
    %865 = vmatpush1.msra.mxu0 0.0
    %866 = vmatprep.subr.mxu0 0.0
    %867 = vmatpush1.msra.mxu0 0.0
    %868 = vmatprep.subr.mxu0 0.0
    %869 = vmatpush1.msra.mxu0 0.0
    %870 = vmatprep.subr.mxu0 0.0
    %871 = vmatpush1.msra.mxu0 0.0
    %872 = vmatprep.subr.mxu0 0.0
    %873 = vmatpush1.msra.mxu0 0.0
    %874 = vmatprep.subr.mxu0 0.0
    %875 = vmatpush1.msra.mxu0 0.0
    %876 = vmatprep.subr.mxu0 0.0
    %877 = vmatpush1.msra.mxu0 0.0
    %878 = vmatprep.subr.mxu0 0.0
    %879 = vmatpush1.msra.mxu0 0.0
    %880 = vmatprep.subr.mxu0 0.0
    %881 = vmatpush1.msra.mxu0 0.0
    %882 = vmatprep.mubr.f32.mxu0 0.0
    %883 = vmatmul.mubr.f32.gmra.mrb[0].mxu0 %v813
    %v884 = vpop.f32.mrb[0].mxu0
    %v885 = vadd.f32 0.0, %v884
    %v886 = vpop.f32.mrb[0].mxu0
    %887 = vmatprep.mubr.f32.mxu0 0.0
    %888 = vmatmul.mubr.f32.gmra.mrb[0].mxu0 %v816
    %v889 = vpop.f32.mrb[0].mxu0
    %v890 = vadd.f32 0.0, %v889
    %v891 = vpop.f32.mrb[0].mxu0
    %892 = vdwg.mxu0
    %v893 = vadd.f32 %v805, %v885
    %v894 = vadd.f32 %v806, %v890
    %v895 = vld [vmem:[%s7] sm:$0xff]
    %v896 = vld [vmem:[%s7 + $0x8] sm:$0xff]
    %v897 = vld [vmem:[%s7 + $0x10] sm:$0xff]
    %v898 = vld [vmem:[%s7 + $0x18] sm:$0xff]
    %v899 = vld [vmem:[#allocation10] sm:$0x1]
    %900 = vst.msk [vmem:[#allocation2] sm:$0xff] %vm131, 0.0
    %901 = vst.msk [vmem:[#allocation2 + $0x8] sm:$0xff] %vm131, 0.0
    %v903 = vrot.slane %v894, 7
    %vm905 = vcmask 1040384
    %v906 = vsel %vm905, %v893, %v903
    %v908 = vlaneseq
    %v909 = vshrl.u32 %v908, 7
    %v910 = vsub.s32 0, %v909
    %v911 = vrot.slane %v899, %v910
    %v913 = vadd.f32 %v906, %v911
    %v914 = vxor.u32 %v913, 2147483648
    %v915 = vmul.f32 %v914, 1.442695
    %v916 = vpow.pop %v915
    %v917 = vadd.f32 %v916, 1.0
    %v918 = vrcp.pop %v917
    %v919 = vmul.f32 1.0, %v918
    %920 = vrot.lane.b32.xlu0 %v911, 64
    %v921 = vpop.permute.xlu0 %920
    %v923 = vmul.f32 %v919, %v921
    %925 = vrot.lane.b32.xlu0 %v923, 64
    %v926 = vpop.permute.xlu0 %925
    %v928 = vadd.f32 %v906, %v926
    %v929 = vtanh.pop %v928
    %v930 = vsub.f32 1.0, %v919
    %932 = vrot.lane.b32.xlu0 %v929, 96
    %v933 = vpop.permute.xlu0 %932
    %v935 = vmul.f32 %v930, %v933
    %937 = vrot.lane.b32.xlu0 %v935, 96
    %v938 = vpop.permute.xlu0 %937
    %vm940 = vcmask 253952
    %941 = vst.msk [vmem:[#allocation2] sm:$0x1] %vm940, %v938
    %vm942 = vcmask 254977
    %943 = vst.msk [vmem:[#allocation2 + $0x7] sm:$0x2] %vm942, %v938
    %v945 = vrot.slane %v893, 1
    %v947 = vsel %vm905, %v945, %v894
    %v948 = vsel %vm131, %v938, 0
    %950 = vmatprep.subr.mxu0 0.0
    %951 = vmatpush1.msra.mxu0 %v895
    %952 = vmatprep.subr.mxu0 0.0
    %953 = vmatpush1.msra.mxu0 %v896
    %954 = vmatprep.subr.mxu0 0.0
    %955 = vmatpush1.msra.mxu0 %v897
    %956 = vmatprep.subr.mxu0 0.0
    %957 = vmatpush1.msra.mxu0 %v898
    %958 = vmatprep.subr.mxu0 0.0
    %959 = vmatpush1.msra.mxu0 0.0
    %960 = vmatprep.subr.mxu0 0.0
    %961 = vmatpush1.msra.mxu0 0.0
    %962 = vmatprep.subr.mxu0 0.0
    %963 = vmatpush1.msra.mxu0 0.0
    %964 = vmatprep.subr.mxu0 0.0
    %965 = vmatpush1.msra.mxu0 0.0
    %966 = vmatprep.subr.mxu0 0.0
    %967 = vmatpush1.msra.mxu0 0.0
    %968 = vmatprep.subr.mxu0 0.0
    %969 = vmatpush1.msra.mxu0 0.0
    %970 = vmatprep.subr.mxu0 0.0
    %971 = vmatpush1.msra.mxu0 0.0
    %972 = vmatprep.subr.mxu0 0.0
    %973 = vmatpush1.msra.mxu0 0.0
    %974 = vmatprep.subr.mxu0 0.0
    %975 = vmatpush1.msra.mxu0 0.0
    %976 = vmatprep.subr.mxu0 0.0
    %977 = vmatpush1.msra.mxu0 0.0
    %978 = vmatprep.subr.mxu0 0.0
    %979 = vmatpush1.msra.mxu0 0.0
    %980 = vmatprep.subr.mxu0 0.0
    %981 = vmatpush1.msra.mxu0 0.0
    %982 = vmatprep.subr.mxu0 0.0
    %983 = vmatpush1.msra.mxu0 0.0
    %984 = vmatprep.subr.mxu0 0.0
    %985 = vmatpush1.msra.mxu0 0.0
    %986 = vmatprep.subr.mxu0 0.0
    %987 = vmatpush1.msra.mxu0 0.0
    %988 = vmatprep.subr.mxu0 0.0
    %989 = vmatpush1.msra.mxu0 0.0
    %990 = vmatprep.subr.mxu0 0.0
    %991 = vmatpush1.msra.mxu0 0.0
    %992 = vmatprep.subr.mxu0 0.0
    %993 = vmatpush1.msra.mxu0 0.0
    %994 = vmatprep.subr.mxu0 0.0
    %995 = vmatpush1.msra.mxu0 0.0
    %996 = vmatprep.subr.mxu0 0.0
    %997 = vmatpush1.msra.mxu0 0.0
    %998 = vmatprep.subr.mxu0 0.0
    %999 = vmatpush1.msra.mxu0 0.0
    %1000 = vmatprep.subr.mxu0 0.0
    %1001 = vmatpush1.msra.mxu0 0.0
    %1002 = vmatprep.subr.mxu0 0.0
    %1003 = vmatpush1.msra.mxu0 0.0
    %1004 = vmatprep.subr.mxu0 0.0
    %1005 = vmatpush1.msra.mxu0 0.0
    %1006 = vmatprep.subr.mxu0 0.0
    %1007 = vmatpush1.msra.mxu0 0.0
    %1008 = vmatprep.subr.mxu0 0.0
    %1009 = vmatpush1.msra.mxu0 0.0
    %1010 = vmatprep.subr.mxu0 0.0
    %1011 = vmatpush1.msra.mxu0 0.0
    %1012 = vmatprep.subr.mxu0 0.0
    %1013 = vmatpush1.msra.mxu0 0.0
    %1014 = vmatprep.mubr.f32.mxu0 0.0
    %1015 = vmatmul.mubr.f32.gmra.mrb[0].mxu0 %v948
    %v1016 = vpop.f32.mrb[0].mxu0
    %v1017 = vadd.f32 %v911, %v1016
    %v1018 = vpop.f32.mrb[0].mxu0
    %1019 = vdwg.mxu0
    %v1020 = vadd.f32 %v947, %v1017
    %v1021 = vxor.u32 %v1020, 2147483648
    %v1022 = vmul.f32 %v1021, 1.442695
    %v1023 = vpow.pop %v1022
    %v1024 = vadd.f32 %v1023, 1.0
    %v1025 = vrcp.pop %v1024
    %v1026 = vmul.f32 1.0, %v1025
    %1028 = vrot.lane.b32.xlu0 %v1017, 64
    %v1029 = vpop.permute.xlu0 %1028
    %v1031 = vmul.f32 %v1026, %v1029
    %1033 = vrot.lane.b32.xlu0 %v1031, 64
    %v1034 = vpop.permute.xlu0 %1033
    %v1036 = vadd.f32 %v947, %v1034
    %v1037 = vtanh.pop %v1036
    %v1038 = vsub.f32 1.0, %v1026
    %1040 = vrot.lane.b32.xlu0 %v1037, 96
    %v1041 = vpop.permute.xlu0 %1040
    %v1043 = vmul.f32 %v1038, %v1041
    %v1044 = vmul.f32 %v1026, %v935
    %v1045 = vadd.f32 %v1043, %v1044
    %1047 = vrot.lane.b32.xlu0 %v1045, 96
    %v1048 = vpop.permute.xlu0 %1047
    %1050 = vst.msk [vmem:[#allocation2 + $0x1] sm:$0x1] %vm940, %v1048
    %1051 = vst.msk [vmem:[#allocation2 + $0x8] sm:$0x2] %vm942, %v1048
    %v1052 = vrot.slane %v893, 2
    %v1054 = vrot.slane %v894, 1
    %v1056 = vsel %vm905, %v1052, %v1054
    %v1057 = vsel %vm131, %v1048, 0
    %1059 = vmatprep.subr.mxu0 0.0
    %1060 = vmatpush1.msra.mxu0 %v895
    %1061 = vmatprep.subr.mxu0 0.0
    %1062 = vmatpush1.msra.mxu0 %v896
    %1063 = vmatprep.subr.mxu0 0.0
    %1064 = vmatpush1.msra.mxu0 %v897
    %1065 = vmatprep.subr.mxu0 0.0
    %1066 = vmatpush1.msra.mxu0 %v898
    %1067 = vmatprep.subr.mxu0 0.0
    %1068 = vmatpush1.msra.mxu0 0.0
    %1069 = vmatprep.subr.mxu0 0.0
    %1070 = vmatpush1.msra.mxu0 0.0
    %1071 = vmatprep.subr.mxu0 0.0
    %1072 = vmatpush1.msra.mxu0 0.0
    %1073 = vmatprep.subr.mxu0 0.0
    %1074 = vmatpush1.msra.mxu0 0.0
    %1075 = vmatprep.subr.mxu0 0.0
    %1076 = vmatpush1.msra.mxu0 0.0
    %1077 = vmatprep.subr.mxu0 0.0
    %1078 = vmatpush1.msra.mxu0 0.0
    %1079 = vmatprep.subr.mxu0 0.0
    %1080 = vmatpush1.msra.mxu0 0.0
    %1081 = vmatprep.subr.mxu0 0.0
    %1082 = vmatpush1.msra.mxu0 0.0
    %1083 = vmatprep.subr.mxu0 0.0
    %1084 = vmatpush1.msra.mxu0 0.0
    %1085 = vmatprep.subr.mxu0 0.0
    %1086 = vmatpush1.msra.mxu0 0.0
    %1087 = vmatprep.subr.mxu0 0.0
    %1088 = vmatpush1.msra.mxu0 0.0
    %1089 = vmatprep.subr.mxu0 0.0
    %1090 = vmatpush1.msra.mxu0 0.0
    %1091 = vmatprep.subr.mxu0 0.0
    %1092 = vmatpush1.msra.mxu0 0.0
    %1093 = vmatprep.subr.mxu0 0.0
    %1094 = vmatpush1.msra.mxu0 0.0
    %1095 = vmatprep.subr.mxu0 0.0
    %1096 = vmatpush1.msra.mxu0 0.0
    %1097 = vmatprep.subr.mxu0 0.0
    %1098 = vmatpush1.msra.mxu0 0.0
    %1099 = vmatprep.subr.mxu0 0.0
    %1100 = vmatpush1.msra.mxu0 0.0
    %1101 = vmatprep.subr.mxu0 0.0
    %1102 = vmatpush1.msra.mxu0 0.0
    %1103 = vmatprep.subr.mxu0 0.0
    %1104 = vmatpush1.msra.mxu0 0.0
    %1105 = vmatprep.subr.mxu0 0.0
    %1106 = vmatpush1.msra.mxu0 0.0
    %1107 = vmatprep.subr.mxu0 0.0
    %1108 = vmatpush1.msra.mxu0 0.0
    %1109 = vmatprep.subr.mxu0 0.0
    %1110 = vmatpush1.msra.mxu0 0.0
    %1111 = vmatprep.subr.mxu0 0.0
    %1112 = vmatpush1.msra.mxu0 0.0
    %1113 = vmatprep.subr.mxu0 0.0
    %1114 = vmatpush1.msra.mxu0 0.0
    %1115 = vmatprep.subr.mxu0 0.0
    %1116 = vmatpush1.msra.mxu0 0.0
    %1117 = vmatprep.subr.mxu0 0.0
    %1118 = vmatpush1.msra.mxu0 0.0
    %1119 = vmatprep.subr.mxu0 0.0
    %1120 = vmatpush1.msra.mxu0 0.0
    %1121 = vmatprep.subr.mxu0 0.0
    %1122 = vmatpush1.msra.mxu0 0.0
    %1123 = vmatprep.mubr.f32.mxu0 0.0
    %1124 = vmatmul.mubr.f32.gmra.mrb[0].mxu0 %v1057
    %v1125 = vpop.f32.mrb[0].mxu0
    %v1126 = vadd.f32 %v911, %v1125
    %v1127 = vpop.f32.mrb[0].mxu0
    %1128 = vdwg.mxu0
    %v1129 = vadd.f32 %v1056, %v1126
    %v1130 = vxor.u32 %v1129, 2147483648
    %v1131 = vmul.f32 %v1130, 1.442695
    %v1132 = vpow.pop %v1131
    %v1133 = vadd.f32 %v1132, 1.0
    %v1134 = vrcp.pop %v1133
    %v1135 = vmul.f32 1.0, %v1134
    %1137 = vrot.lane.b32.xlu0 %v1126, 64
    %v1138 = vpop.permute.xlu0 %1137
    %v1140 = vmul.f32 %v1135, %v1138
    %1142 = vrot.lane.b32.xlu0 %v1140, 64
    %v1143 = vpop.permute.xlu0 %1142
    %v1145 = vadd.f32 %v1056, %v1143
    %v1146 = vtanh.pop %v1145
    %v1147 = vsub.f32 1.0, %v1135
    %1149 = vrot.lane.b32.xlu0 %v1146, 96
    %v1150 = vpop.permute.xlu0 %1149
    %v1152 = vmul.f32 %v1147, %v1150
    %v1153 = vmul.f32 %v1135, %v1045
    %v1154 = vadd.f32 %v1152, %v1153
    %1156 = vrot.lane.b32.xlu0 %v1154, 96
    %v1157 = vpop.permute.xlu0 %1156
    %1159 = vst.msk [vmem:[#allocation2 + $0x2] sm:$0x1] %vm940, %v1157
    %1160 = vst.msk [vmem:[#allocation2 + $0x9] sm:$0x2] %vm942, %v1157
    %v1161 = vrot.slane %v893, 3
    %v1163 = vrot.slane %v894, 2
    %v1165 = vsel %vm905, %v1161, %v1163
    %v1166 = vsel %vm131, %v1157, 0
    %1168 = vmatprep.subr.mxu0 0.0
    %1169 = vmatpush1.msra.mxu0 %v895
    %1170 = vmatprep.subr.mxu0 0.0
    %1171 = vmatpush1.msra.mxu0 %v896
    %1172 = vmatprep.subr.mxu0 0.0
    %1173 = vmatpush1.msra.mxu0 %v897
    %1174 = vmatprep.subr.mxu0 0.0
    %1175 = vmatpush1.msra.mxu0 %v898
    %1176 = vmatprep.subr.mxu0 0.0
    %1177 = vmatpush1.msra.mxu0 0.0
    %1178 = vmatprep.subr.mxu0 0.0
    %1179 = vmatpush1.msra.mxu0 0.0
    %1180 = vmatprep.subr.mxu0 0.0
    %1181 = vmatpush1.msra.mxu0 0.0
    %1182 = vmatprep.subr.mxu0 0.0
    %1183 = vmatpush1.msra.mxu0 0.0
    %1184 = vmatprep.subr.mxu0 0.0
    %1185 = vmatpush1.msra.mxu0 0.0
    %1186 = vmatprep.subr.mxu0 0.0
    %1187 = vmatpush1.msra.mxu0 0.0
    %1188 = vmatprep.subr.mxu0 0.0
    %1189 = vmatpush1.msra.mxu0 0.0
    %1190 = vmatprep.subr.mxu0 0.0
    %1191 = vmatpush1.msra.mxu0 0.0
    %1192 = vmatprep.subr.mxu0 0.0
    %1193 = vmatpush1.msra.mxu0 0.0
    %1194 = vmatprep.subr.mxu0 0.0
    %1195 = vmatpush1.msra.mxu0 0.0
    %1196 = vmatprep.subr.mxu0 0.0
    %1197 = vmatpush1.msra.mxu0 0.0
    %1198 = vmatprep.subr.mxu0 0.0
    %1199 = vmatpush1.msra.mxu0 0.0
    %1200 = vmatprep.subr.mxu0 0.0
    %1201 = vmatpush1.msra.mxu0 0.0
    %1202 = vmatprep.subr.mxu0 0.0
    %1203 = vmatpush1.msra.mxu0 0.0
    %1204 = vmatprep.subr.mxu0 0.0
    %1205 = vmatpush1.msra.mxu0 0.0
    %1206 = vmatprep.subr.mxu0 0.0
    %1207 = vmatpush1.msra.mxu0 0.0
    %1208 = vmatprep.subr.mxu0 0.0
    %1209 = vmatpush1.msra.mxu0 0.0
    %1210 = vmatprep.subr.mxu0 0.0
    %1211 = vmatpush1.msra.mxu0 0.0
    %1212 = vmatprep.subr.mxu0 0.0
    %1213 = vmatpush1.msra.mxu0 0.0
    %1214 = vmatprep.subr.mxu0 0.0
    %1215 = vmatpush1.msra.mxu0 0.0
    %1216 = vmatprep.subr.mxu0 0.0
    %1217 = vmatpush1.msra.mxu0 0.0
    %1218 = vmatprep.subr.mxu0 0.0
    %1219 = vmatpush1.msra.mxu0 0.0
    %1220 = vmatprep.subr.mxu0 0.0
    %1221 = vmatpush1.msra.mxu0 0.0
    %1222 = vmatprep.subr.mxu0 0.0
    %1223 = vmatpush1.msra.mxu0 0.0
    %1224 = vmatprep.subr.mxu0 0.0
    %1225 = vmatpush1.msra.mxu0 0.0
    %1226 = vmatprep.subr.mxu0 0.0
    %1227 = vmatpush1.msra.mxu0 0.0
    %1228 = vmatprep.subr.mxu0 0.0
    %1229 = vmatpush1.msra.mxu0 0.0
    %1230 = vmatprep.subr.mxu0 0.0
    %1231 = vmatpush1.msra.mxu0 0.0
    %1232 = vmatprep.mubr.f32.mxu0 0.0
    %1233 = vmatmul.mubr.f32.gmra.mrb[0].mxu0 %v1166
    %v1234 = vpop.f32.mrb[0].mxu0
    %v1235 = vadd.f32 %v911, %v1234
    %v1236 = vpop.f32.mrb[0].mxu0
    %1237 = vdwg.mxu0
    %v1238 = vadd.f32 %v1165, %v1235
    %v1239 = vxor.u32 %v1238, 2147483648
    %v1240 = vmul.f32 %v1239, 1.442695
    %v1241 = vpow.pop %v1240
    %v1242 = vadd.f32 %v1241, 1.0
    %v1243 = vrcp.pop %v1242
    %v1244 = vmul.f32 1.0, %v1243
    %1246 = vrot.lane.b32.xlu0 %v1235, 64
    %v1247 = vpop.permute.xlu0 %1246
    %v1249 = vmul.f32 %v1244, %v1247
    %1251 = vrot.lane.b32.xlu0 %v1249, 64
    %v1252 = vpop.permute.xlu0 %1251
    %v1254 = vadd.f32 %v1165, %v1252
    %v1255 = vtanh.pop %v1254
    %v1256 = vsub.f32 1.0, %v1244
    %1258 = vrot.lane.b32.xlu0 %v1255, 96
    %v1259 = vpop.permute.xlu0 %1258
    %v1261 = vmul.f32 %v1256, %v1259
    %v1262 = vmul.f32 %v1244, %v1154
    %v1263 = vadd.f32 %v1261, %v1262
    %1265 = vrot.lane.b32.xlu0 %v1263, 96
    %v1266 = vpop.permute.xlu0 %1265
    %1268 = vst.msk [vmem:[#allocation2 + $0x3] sm:$0x1] %vm940, %v1266
    %1269 = vst.msk [vmem:[#allocation2 + $0xa] sm:$0x2] %vm942, %v1266
    %v1270 = vrot.slane %v893, 4
    %v1272 = vrot.slane %v894, 3
    %v1274 = vsel %vm905, %v1270, %v1272
    %v1275 = vsel %vm131, %v1266, 0
    %1277 = vmatprep.subr.mxu0 0.0
    %1278 = vmatpush1.msra.mxu0 %v895
    %1279 = vmatprep.subr.mxu0 0.0
    %1280 = vmatpush1.msra.mxu0 %v896
    %1281 = vmatprep.subr.mxu0 0.0
    %1282 = vmatpush1.msra.mxu0 %v897
    %1283 = vmatprep.subr.mxu0 0.0
    %1284 = vmatpush1.msra.mxu0 %v898
    %1285 = vmatprep.subr.mxu0 0.0
    %1286 = vmatpush1.msra.mxu0 0.0
    %1287 = vmatprep.subr.mxu0 0.0
    %1288 = vmatpush1.msra.mxu0 0.0
    %1289 = vmatprep.subr.mxu0 0.0
    %1290 = vmatpush1.msra.mxu0 0.0
    %1291 = vmatprep.subr.mxu0 0.0
    %1292 = vmatpush1.msra.mxu0 0.0
    %1293 = vmatprep.subr.mxu0 0.0
    %1294 = vmatpush1.msra.mxu0 0.0
    %1295 = vmatprep.subr.mxu0 0.0
    %1296 = vmatpush1.msra.mxu0 0.0
    %1297 = vmatprep.subr.mxu0 0.0
    %1298 = vmatpush1.msra.mxu0 0.0
    %1299 = vmatprep.subr.mxu0 0.0
    %1300 = vmatpush1.msra.mxu0 0.0
    %1301 = vmatprep.subr.mxu0 0.0
    %1302 = vmatpush1.msra.mxu0 0.0
    %1303 = vmatprep.subr.mxu0 0.0
    %1304 = vmatpush1.msra.mxu0 0.0
    %1305 = vmatprep.subr.mxu0 0.0
    %1306 = vmatpush1.msra.mxu0 0.0
    %1307 = vmatprep.subr.mxu0 0.0
    %1308 = vmatpush1.msra.mxu0 0.0
    %1309 = vmatprep.subr.mxu0 0.0
    %1310 = vmatpush1.msra.mxu0 0.0
    %1311 = vmatprep.subr.mxu0 0.0
    %1312 = vmatpush1.msra.mxu0 0.0
    %1313 = vmatprep.subr.mxu0 0.0
    %1314 = vmatpush1.msra.mxu0 0.0
    %1315 = vmatprep.subr.mxu0 0.0
    %1316 = vmatpush1.msra.mxu0 0.0
    %1317 = vmatprep.subr.mxu0 0.0
    %1318 = vmatpush1.msra.mxu0 0.0
    %1319 = vmatprep.subr.mxu0 0.0
    %1320 = vmatpush1.msra.mxu0 0.0
    %1321 = vmatprep.subr.mxu0 0.0
    %1322 = vmatpush1.msra.mxu0 0.0
    %1323 = vmatprep.subr.mxu0 0.0
    %1324 = vmatpush1.msra.mxu0 0.0
    %1325 = vmatprep.subr.mxu0 0.0
    %1326 = vmatpush1.msra.mxu0 0.0
    %1327 = vmatprep.subr.mxu0 0.0
    %1328 = vmatpush1.msra.mxu0 0.0
    %1329 = vmatprep.subr.mxu0 0.0
    %1330 = vmatpush1.msra.mxu0 0.0
    %1331 = vmatprep.subr.mxu0 0.0
    %1332 = vmatpush1.msra.mxu0 0.0
    %1333 = vmatprep.subr.mxu0 0.0
    %1334 = vmatpush1.msra.mxu0 0.0
    %1335 = vmatprep.subr.mxu0 0.0
    %1336 = vmatpush1.msra.mxu0 0.0
    %1337 = vmatprep.subr.mxu0 0.0
    %1338 = vmatpush1.msra.mxu0 0.0
    %1339 = vmatprep.subr.mxu0 0.0
    %1340 = vmatpush1.msra.mxu0 0.0
    %1341 = vmatprep.mubr.f32.mxu0 0.0
    %1342 = vmatmul.mubr.f32.gmra.mrb[0].mxu0 %v1275
    %v1343 = vpop.f32.mrb[0].mxu0
    %v1344 = vadd.f32 %v911, %v1343
    %v1345 = vpop.f32.mrb[0].mxu0
    %1346 = vdwg.mxu0
    %v1347 = vadd.f32 %v1274, %v1344
    %v1348 = vxor.u32 %v1347, 2147483648
    %v1349 = vmul.f32 %v1348, 1.442695
    %v1350 = vpow.pop %v1349
    %v1351 = vadd.f32 %v1350, 1.0
    %v1352 = vrcp.pop %v1351
    %v1353 = vmul.f32 1.0, %v1352
    %1355 = vrot.lane.b32.xlu0 %v1344, 64
    %v1356 = vpop.permute.xlu0 %1355
    %v1358 = vmul.f32 %v1353, %v1356
    %1360 = vrot.lane.b32.xlu0 %v1358, 64
    %v1361 = vpop.permute.xlu0 %1360
    %v1363 = vadd.f32 %v1274, %v1361
    %v1364 = vtanh.pop %v1363
    %v1365 = vsub.f32 1.0, %v1353
    %1367 = vrot.lane.b32.xlu0 %v1364, 96
    %v1368 = vpop.permute.xlu0 %1367
    %v1370 = vmul.f32 %v1365, %v1368
    %v1371 = vmul.f32 %v1353, %v1263
    %v1372 = vadd.f32 %v1370, %v1371
    %1374 = vrot.lane.b32.xlu0 %v1372, 96
    %v1375 = vpop.permute.xlu0 %1374
    %1377 = vst.msk [vmem:[#allocation2 + $0x4] sm:$0x1] %vm940, %v1375
    %1378 = vst.msk [vmem:[#allocation2 + $0xb] sm:$0x2] %vm942, %v1375
    %v1379 = vrot.slane %v893, 5
    %v1381 = vrot.slane %v894, 4
    %v1383 = vsel %vm905, %v1379, %v1381
    %v1384 = vsel %vm131, %v1375, 0
    %1386 = vmatprep.subr.mxu0 0.0
    %1387 = vmatpush1.msra.mxu0 %v895
    %1388 = vmatprep.subr.mxu0 0.0
    %1389 = vmatpush1.msra.mxu0 %v896
    %1390 = vmatprep.subr.mxu0 0.0
    %1391 = vmatpush1.msra.mxu0 %v897
    %1392 = vmatprep.subr.mxu0 0.0
    %1393 = vmatpush1.msra.mxu0 %v898
    %1394 = vmatprep.subr.mxu0 0.0
    %1395 = vmatpush1.msra.mxu0 0.0
    %1396 = vmatprep.subr.mxu0 0.0
    %1397 = vmatpush1.msra.mxu0 0.0
    %1398 = vmatprep.subr.mxu0 0.0
    %1399 = vmatpush1.msra.mxu0 0.0
    %1400 = vmatprep.subr.mxu0 0.0
    %1401 = vmatpush1.msra.mxu0 0.0
    %1402 = vmatprep.subr.mxu0 0.0
    %1403 = vmatpush1.msra.mxu0 0.0
    %1404 = vmatprep.subr.mxu0 0.0
    %1405 = vmatpush1.msra.mxu0 0.0
    %1406 = vmatprep.subr.mxu0 0.0
    %1407 = vmatpush1.msra.mxu0 0.0
    %1408 = vmatprep.subr.mxu0 0.0
    %1409 = vmatpush1.msra.mxu0 0.0
    %1410 = vmatprep.subr.mxu0 0.0
    %1411 = vmatpush1.msra.mxu0 0.0
    %1412 = vmatprep.subr.mxu0 0.0
    %1413 = vmatpush1.msra.mxu0 0.0
    %1414 = vmatprep.subr.mxu0 0.0
    %1415 = vmatpush1.msra.mxu0 0.0
    %1416 = vmatprep.subr.mxu0 0.0
    %1417 = vmatpush1.msra.mxu0 0.0
    %1418 = vmatprep.subr.mxu0 0.0
    %1419 = vmatpush1.msra.mxu0 0.0
    %1420 = vmatprep.subr.mxu0 0.0
    %1421 = vmatpush1.msra.mxu0 0.0
    %1422 = vmatprep.subr.mxu0 0.0
    %1423 = vmatpush1.msra.mxu0 0.0
    %1424 = vmatprep.subr.mxu0 0.0
    %1425 = vmatpush1.msra.mxu0 0.0
    %1426 = vmatprep.subr.mxu0 0.0
    %1427 = vmatpush1.msra.mxu0 0.0
    %1428 = vmatprep.subr.mxu0 0.0
    %1429 = vmatpush1.msra.mxu0 0.0
    %1430 = vmatprep.subr.mxu0 0.0
    %1431 = vmatpush1.msra.mxu0 0.0
    %1432 = vmatprep.subr.mxu0 0.0
    %1433 = vmatpush1.msra.mxu0 0.0
    %1434 = vmatprep.subr.mxu0 0.0
    %1435 = vmatpush1.msra.mxu0 0.0
    %1436 = vmatprep.subr.mxu0 0.0
    %1437 = vmatpush1.msra.mxu0 0.0
    %1438 = vmatprep.subr.mxu0 0.0
    %1439 = vmatpush1.msra.mxu0 0.0
    %1440 = vmatprep.subr.mxu0 0.0
    %1441 = vmatpush1.msra.mxu0 0.0
    %1442 = vmatprep.subr.mxu0 0.0
    %1443 = vmatpush1.msra.mxu0 0.0
    %1444 = vmatprep.subr.mxu0 0.0
    %1445 = vmatpush1.msra.mxu0 0.0
    %1446 = vmatprep.subr.mxu0 0.0
    %1447 = vmatpush1.msra.mxu0 0.0
    %1448 = vmatprep.subr.mxu0 0.0
    %1449 = vmatpush1.msra.mxu0 0.0
    %1450 = vmatprep.mubr.f32.mxu0 0.0
    %1451 = vmatmul.mubr.f32.gmra.mrb[0].mxu0 %v1384
    %v1452 = vpop.f32.mrb[0].mxu0
    %v1453 = vadd.f32 %v911, %v1452
    %v1454 = vpop.f32.mrb[0].mxu0
    %1455 = vdwg.mxu0
    %v1456 = vadd.f32 %v1383, %v1453
    %v1457 = vxor.u32 %v1456, 2147483648
    %v1458 = vmul.f32 %v1457, 1.442695
    %v1459 = vpow.pop %v1458
    %v1460 = vadd.f32 %v1459, 1.0
    %v1461 = vrcp.pop %v1460
    %v1462 = vmul.f32 1.0, %v1461
    %1464 = vrot.lane.b32.xlu0 %v1453, 64
    %v1465 = vpop.permute.xlu0 %1464
    %v1467 = vmul.f32 %v1462, %v1465
    %1469 = vrot.lane.b32.xlu0 %v1467, 64
    %v1470 = vpop.permute.xlu0 %1469
    %v1472 = vadd.f32 %v1383, %v1470
    %v1473 = vtanh.pop %v1472
    %v1474 = vsub.f32 1.0, %v1462
    %1476 = vrot.lane.b32.xlu0 %v1473, 96
    %v1477 = vpop.permute.xlu0 %1476
    %v1479 = vmul.f32 %v1474, %v1477
    %v1480 = vmul.f32 %v1462, %v1372
    %v1481 = vadd.f32 %v1479, %v1480
    %1483 = vrot.lane.b32.xlu0 %v1481, 96
    %v1484 = vpop.permute.xlu0 %1483
    %1486 = vst.msk [vmem:[#allocation2 + $0x5] sm:$0x1] %vm940, %v1484
    %1487 = vst.msk [vmem:[#allocation2 + $0xc] sm:$0x2] %vm942, %v1484
    %v1488 = vrot.slane %v893, 6
    %v1490 = vrot.slane %v894, 5
    %v1492 = vsel %vm905, %v1488, %v1490
    %v1493 = vsel %vm131, %v1484, 0
    %1495 = vmatprep.subr.mxu0 0.0
    %1496 = vmatpush1.msra.mxu0 %v895
    %1497 = vmatprep.subr.mxu0 0.0
    %1498 = vmatpush1.msra.mxu0 %v896
    %1499 = vmatprep.subr.mxu0 0.0
    %1500 = vmatpush1.msra.mxu0 %v897
    %1501 = vmatprep.subr.mxu0 0.0
    %1502 = vmatpush1.msra.mxu0 %v898
    %1503 = vmatprep.subr.mxu0 0.0
    %1504 = vmatpush1.msra.mxu0 0.0
    %1505 = vmatprep.subr.mxu0 0.0
    %1506 = vmatpush1.msra.mxu0 0.0
    %1507 = vmatprep.subr.mxu0 0.0
    %1508 = vmatpush1.msra.mxu0 0.0
    %1509 = vmatprep.subr.mxu0 0.0
    %1510 = vmatpush1.msra.mxu0 0.0
    %1511 = vmatprep.subr.mxu0 0.0
    %1512 = vmatpush1.msra.mxu0 0.0
    %1513 = vmatprep.subr.mxu0 0.0
    %1514 = vmatpush1.msra.mxu0 0.0
    %1515 = vmatprep.subr.mxu0 0.0
    %1516 = vmatpush1.msra.mxu0 0.0
    %1517 = vmatprep.subr.mxu0 0.0
    %1518 = vmatpush1.msra.mxu0 0.0
    %1519 = vmatprep.subr.mxu0 0.0
    %1520 = vmatpush1.msra.mxu0 0.0
    %1521 = vmatprep.subr.mxu0 0.0
    %1522 = vmatpush1.msra.mxu0 0.0
    %1523 = vmatprep.subr.mxu0 0.0
    %1524 = vmatpush1.msra.mxu0 0.0
    %1525 = vmatprep.subr.mxu0 0.0
    %1526 = vmatpush1.msra.mxu0 0.0
    %1527 = vmatprep.subr.mxu0 0.0
    %1528 = vmatpush1.msra.mxu0 0.0
    %1529 = vmatprep.subr.mxu0 0.0
    %1530 = vmatpush1.msra.mxu0 0.0
    %1531 = vmatprep.subr.mxu0 0.0
    %1532 = vmatpush1.msra.mxu0 0.0
    %1533 = vmatprep.subr.mxu0 0.0
    %1534 = vmatpush1.msra.mxu0 0.0
    %1535 = vmatprep.subr.mxu0 0.0
    %1536 = vmatpush1.msra.mxu0 0.0
    %1537 = vmatprep.subr.mxu0 0.0
    %1538 = vmatpush1.msra.mxu0 0.0
    %1539 = vmatprep.subr.mxu0 0.0
    %1540 = vmatpush1.msra.mxu0 0.0
    %1541 = vmatprep.subr.mxu0 0.0
    %1542 = vmatpush1.msra.mxu0 0.0
    %1543 = vmatprep.subr.mxu0 0.0
    %1544 = vmatpush1.msra.mxu0 0.0
    %1545 = vmatprep.subr.mxu0 0.0
    %1546 = vmatpush1.msra.mxu0 0.0
    %1547 = vmatprep.subr.mxu0 0.0
    %1548 = vmatpush1.msra.mxu0 0.0
    %1549 = vmatprep.subr.mxu0 0.0
    %1550 = vmatpush1.msra.mxu0 0.0
    %1551 = vmatprep.subr.mxu0 0.0
    %1552 = vmatpush1.msra.mxu0 0.0
    %1553 = vmatprep.subr.mxu0 0.0
    %1554 = vmatpush1.msra.mxu0 0.0
    %1555 = vmatprep.subr.mxu0 0.0
    %1556 = vmatpush1.msra.mxu0 0.0
    %1557 = vmatprep.subr.mxu0 0.0
    %1558 = vmatpush1.msra.mxu0 0.0
    %1559 = vmatprep.mubr.f32.mxu0 0.0
    %1560 = vmatmul.mubr.f32.gmra.mrb[0].mxu0 %v1493
    %v1561 = vpop.f32.mrb[0].mxu0
    %v1562 = vadd.f32 %v911, %v1561
    %v1563 = vpop.f32.mrb[0].mxu0
    %1564 = vdwg.mxu0
    %v1565 = vadd.f32 %v1492, %v1562
    %v1566 = vxor.u32 %v1565, 2147483648
    %v1567 = vmul.f32 %v1566, 1.442695
    %v1568 = vpow.pop %v1567
    %v1569 = vadd.f32 %v1568, 1.0
    %v1570 = vrcp.pop %v1569
    %v1571 = vmul.f32 1.0, %v1570
    %1573 = vrot.lane.b32.xlu0 %v1562, 64
    %v1574 = vpop.permute.xlu0 %1573
    %v1576 = vmul.f32 %v1571, %v1574
    %1578 = vrot.lane.b32.xlu0 %v1576, 64
    %v1579 = vpop.permute.xlu0 %1578
    %v1581 = vadd.f32 %v1492, %v1579
    %v1582 = vtanh.pop %v1581
    %v1583 = vsub.f32 1.0, %v1571
    %1585 = vrot.lane.b32.xlu0 %v1582, 96
    %v1586 = vpop.permute.xlu0 %1585
    %v1588 = vmul.f32 %v1583, %v1586
    %v1589 = vmul.f32 %v1571, %v1481
    %v1590 = vadd.f32 %v1588, %v1589
    %1592 = vrot.lane.b32.xlu0 %v1590, 96
    %v1593 = vpop.permute.xlu0 %1592
    %1595 = vst.msk [vmem:[#allocation2 + $0x6] sm:$0x1] %vm940, %v1593
    %1596 = vst.msk [vmem:[#allocation2 + $0xd] sm:$0x2] %vm942, %v1593
    %v1597 = vld [vmem:[#allocation2] sm:$0xff]
    %v1598 = vld [vmem:[#allocation2 + $0x8] sm:$0xff]
    %v1599 = vld [vmem:[#allocation12] sm:$0xff]
    %v1600 = vld [vmem:[#allocation12 + $0x8] sm:$0xff]
    %v1601 = vld [vmem:[#allocation12 + $0x10] sm:$0xff]
    %v1602 = vld [vmem:[#allocation12 + $0x18] sm:$0xff]
    %v1603 = vld [vmem:[#allocation13] sm:$0x1]
    %v1605 = vlaneseq
    %v1606 = vshrl.u32 %v1605, 7
    %v1607 = vsub.s32 0, %v1606
    %v1608 = vrot.slane %v1603, %v1607
    %v1611 = vsel %vm131, %v1597, 0
    %v1614 = vsel %vm131, %v1598, 0
    %1616 = vmatprep.subr.mxu0 0.0
    %1617 = vmatpush1.msra.mxu0 %v1599
    %1618 = vmatprep.subr.mxu0 0.0
    %1619 = vmatpush1.msra.mxu0 %v1600
    %1620 = vmatprep.subr.mxu0 0.0
    %1621 = vmatpush1.msra.mxu0 %v1601
    %1622 = vmatprep.subr.mxu0 0.0
    %1623 = vmatpush1.msra.mxu0 %v1602
    %1624 = vmatprep.subr.mxu0 0.0
    %1625 = vmatpush1.msra.mxu0 0.0
    %1626 = vmatprep.subr.mxu0 0.0
    %1627 = vmatpush1.msra.mxu0 0.0
    %1628 = vmatprep.subr.mxu0 0.0
    %1629 = vmatpush1.msra.mxu0 0.0
    %1630 = vmatprep.subr.mxu0 0.0
    %1631 = vmatpush1.msra.mxu0 0.0
    %1632 = vmatprep.subr.mxu0 0.0
    %1633 = vmatpush1.msra.mxu0 0.0
    %1634 = vmatprep.subr.mxu0 0.0
    %1635 = vmatpush1.msra.mxu0 0.0
    %1636 = vmatprep.subr.mxu0 0.0
    %1637 = vmatpush1.msra.mxu0 0.0
    %1638 = vmatprep.subr.mxu0 0.0
    %1639 = vmatpush1.msra.mxu0 0.0
    %1640 = vmatprep.subr.mxu0 0.0
    %1641 = vmatpush1.msra.mxu0 0.0
    %1642 = vmatprep.subr.mxu0 0.0
    %1643 = vmatpush1.msra.mxu0 0.0
    %1644 = vmatprep.subr.mxu0 0.0
    %1645 = vmatpush1.msra.mxu0 0.0
    %1646 = vmatprep.subr.mxu0 0.0
    %1647 = vmatpush1.msra.mxu0 0.0
    %1648 = vmatprep.subr.mxu0 0.0
    %1649 = vmatpush1.msra.mxu0 0.0
    %1650 = vmatprep.subr.mxu0 0.0
    %1651 = vmatpush1.msra.mxu0 0.0
    %1652 = vmatprep.subr.mxu0 0.0
    %1653 = vmatpush1.msra.mxu0 0.0
    %1654 = vmatprep.subr.mxu0 0.0
    %1655 = vmatpush1.msra.mxu0 0.0
    %1656 = vmatprep.subr.mxu0 0.0
    %1657 = vmatpush1.msra.mxu0 0.0
    %1658 = vmatprep.subr.mxu0 0.0
    %1659 = vmatpush1.msra.mxu0 0.0
    %1660 = vmatprep.subr.mxu0 0.0
    %1661 = vmatpush1.msra.mxu0 0.0
    %1662 = vmatprep.subr.mxu0 0.0
    %1663 = vmatpush1.msra.mxu0 0.0
    %1664 = vmatprep.subr.mxu0 0.0
    %1665 = vmatpush1.msra.mxu0 0.0
    %1666 = vmatprep.subr.mxu0 0.0
    %1667 = vmatpush1.msra.mxu0 0.0
    %1668 = vmatprep.subr.mxu0 0.0
    %1669 = vmatpush1.msra.mxu0 0.0
    %1670 = vmatprep.subr.mxu0 0.0
    %1671 = vmatpush1.msra.mxu0 0.0
    %1672 = vmatprep.subr.mxu0 0.0
    %1673 = vmatpush1.msra.mxu0 0.0
    %1674 = vmatprep.subr.mxu0 0.0
    %1675 = vmatpush1.msra.mxu0 0.0
    %1676 = vmatprep.subr.mxu0 0.0
    %1677 = vmatpush1.msra.mxu0 0.0
    %1678 = vmatprep.subr.mxu0 0.0
    %1679 = vmatpush1.msra.mxu0 0.0
    %1680 = vmatprep.mubr.f32.mxu0 0.0
    %1681 = vmatmul.mubr.f32.gmra.mrb[0].mxu0 %v1611
    %v1682 = vpop.f32.mrb[0].mxu0
    %v1683 = vadd.f32 %v1608, %v1682
    %v1684 = vpop.f32.mrb[0].mxu0
    %1685 = vmatprep.mubr.f32.mxu0 0.0
    %1686 = vmatmul.mubr.f32.gmra.mrb[0].mxu0 %v1614
    %v1687 = vpop.f32.mrb[0].mxu0
    %v1688 = vadd.f32 %v1608, %v1687
    %v1689 = vpop.f32.mrb[0].mxu0
    %1690 = vdwg.mxu0
    %1691 = vst [vmem:[%s11] sm:$0xff] %v1683
    %s1692 = scalar_lea.vmem %s11, 8
    %1693 = vst [vmem:[%s1692] sm:$0xff] %v1688
    // Predicated region
    $region66: #{model_wrapper_forward.1} parent=1 // pred_check
      _
    $region67: #{model_wrapper_forward.1} parent=1 // pred_check_branch
      %1695 = sbr.rel (0) target = $region69
    $region68: #{model_wrapper_forward.1} parent=1 // pred_region
      _
    $region69: #{model_wrapper_forward.1} parent=1 // pred_fallthru
      _
    // Predicated region
    $region70: #{model_wrapper_forward.1} parent=1 // pred_check
      _
    $region71: #{model_wrapper_forward.1} parent=1 // pred_check_branch
      %1697 = sbr.rel (0) target = $region73
    $region72: #{model_wrapper_forward.1} parent=1 // pred_region
      _
    $region73: #{model_wrapper_forward.1} parent=1 // pred_fallthru
      _
    %1698 = vsyncpa [#allocation6], 1
    %1699 = vsyncpa [#allocation8], 1
    %1700 = vsyncpa [#allocation11], 1
    %1701 = vsyncpa [#allocation14], 1

</llo_original>
